<compile_context>
chip_gen: v5e
topology: v5e:2x2
jax: 0.10.0
libtpu: 0.0.40
codegen_flags: <defaults>
</compile_context>

<pallas_src>
import functools
import math

import jax
import jax.numpy as jnp
from jax import lax
from jax.experimental import pallas as pl
from jax.experimental.pallas import tpu as pltpu


def _layer_norm(x, gamma, beta, eps=1e-5):
    # PyTorch LayerNorm: biased variance over last dim, eps inside rsqrt.
    mean = jnp.mean(x, axis=-1, keepdims=True)
    var = jnp.mean((x - mean) ** 2, axis=-1, keepdims=True)
    return (x - mean) * lax.rsqrt(var + eps) * gamma + beta


def _gelu(x):
    # TODO(synk): F.gelu default is erf-exact; using the tanh approximation
    # (difference ~1e-3) since erf lowering in Mosaic is not guaranteed.
    c = math.sqrt(2.0 / math.pi)
    return 0.5 * x * (1.0 + jnp.tanh(c * (x + 0.044715 * x * x * x)))


def encoder_layer_kernel(
    x_ref,
    wq_ref, wk_ref, wv_ref, wo_ref,
    bq_ref, bk_ref, bv_ref, bo_ref,
    g1_ref, be1_ref,
    w1_ref, b1_ref, w2_ref, b2_ref,
    g2_ref, be2_ref,
    o_ref,
    *, nhead,
):
    x = x_ref[...].astype(jnp.float32)            # (S, D) f32
    S, D = x.shape
    hd = D // nhead
    scale = 1.0 / math.sqrt(hd)

    x_bf = x.astype(jnp.bfloat16)                 # MXU operand

    # --- self attention: QKV projections (bf16 MXU, f32 accumulate) ---------
    q = jnp.dot(x_bf, wq_ref[...], preferred_element_type=jnp.float32) + bq_ref[...]
    k = jnp.dot(x_bf, wk_ref[...], preferred_element_type=jnp.float32) + bk_ref[...]
    v = jnp.dot(x_bf, wv_ref[...], preferred_element_type=jnp.float32) + bv_ref[...]

    q_bf = q.astype(jnp.bfloat16)
    k_bf = k.astype(jnp.bfloat16)
    v_bf = v.astype(jnp.bfloat16)

    # Fold the output projection into the head loop: accumulate
    #   attn += softmax(q_h k_h^T) v_h @ Wo[h*hd:(h+1)*hd, :]
    # into one (S, D) f32 buffer — no per-head concat, no K transpose.
    dn = (((1,), (1,)), ((), ()))                 # contract last dims, no batch
    attn = jnp.zeros((S, D), jnp.float32)
    for h in range(nhead):                        # static unrolled loop over heads
        qh = q_bf[:, h * hd:(h + 1) * hd]         # (S, hd)
        kh = k_bf[:, h * hd:(h + 1) * hd]
        vh = v_bf[:, h * hd:(h + 1) * hd]
        s = lax.dot_general(qh, kh, dn,
                            preferred_element_type=jnp.float32) * scale  # (S, S)
        s = s - jnp.max(s, axis=-1, keepdims=True)
        p = jnp.exp(s)                            # f32 softmax numerics
        inv = pl.reciprocal(jnp.sum(p, axis=-1, keepdims=True), approx=True)
        p = p * inv
        head_out = jnp.dot(p.astype(jnp.bfloat16), vh,
                           preferred_element_type=jnp.float32)            # (S, hd)
        attn = attn + jnp.dot(head_out.astype(jnp.bfloat16),
                              wo_ref[h * hd:(h + 1) * hd, :],
                              preferred_element_type=jnp.float32)
    attn = attn + bo_ref[...]

    # residual + norm1   (dropout1 == identity in eval mode)
    y = _layer_norm(x + attn, g1_ref[...], be1_ref[...])

    # --- feed-forward (bf16 MXU, f32 elementwise) ----------------------------
    h1 = jnp.dot(y.astype(jnp.bfloat16), w1_ref[...],
                 preferred_element_type=jnp.float32) + b1_ref[...]
    h1 = _gelu(h1)                                # dropout == identity
    z = jnp.dot(h1.astype(jnp.bfloat16), w2_ref[...],
                preferred_element_type=jnp.float32) + b2_ref[...]

    # residual + norm2   (dropout2 == identity in eval mode)
    out = _layer_norm(y + z, g2_ref[...], be2_ref[...])
    o_ref[...] = out.astype(o_ref.dtype)


def transformer_encoder_layer(x, params, nhead):
    B, S, D = x.shape
    Fdim = params["w1"].shape[1]
    bf16 = jnp.bfloat16

    # Weights / biases / LN params: whole array resident in VMEM, single
    # buffered (no per-grid-step double buffering of grid-invariant operands).
    vmem_full = pl.BlockSpec(memory_space=pltpu.MemorySpace.VMEM)

    in_specs = [pl.BlockSpec((None, S, D), lambda b: (b, 0, 0))] + [vmem_full] * 16
    out_specs = pl.BlockSpec((None, S, D), lambda b: (b, 0, 0))

    # Explicit VMEM budget: bf16 weights (single-buffered) + f32 small params
    # + double-buffered activation blocks + in-kernel intermediates, with slack.
    weight_bytes = (4 * D * D + 2 * D * Fdim) * 2
    small_bytes = (7 * D + Fdim) * 4
    act_bytes = 2 * 2 * (S * D) * 4                       # x + out, double-buffered
    interm_bytes = (8 * S * D + S * S + S * Fdim) * 4
    est = weight_bytes + small_bytes + act_bytes + interm_bytes
    vmem_limit = max(32 * 1024 * 1024,
                     min(100 * 1024 * 1024, int(1.5 * est) + (2 << 20)))

    cost = pl.CostEstimate(
        flops=2 * B * S * D * (4 * D + 2 * S + 2 * Fdim),
        transcendentals=B * S * (nhead * S + Fdim),
        bytes_accessed=weight_bytes + 2 * B * S * D * 4,
    )

    kernel = functools.partial(encoder_layer_kernel, nhead=nhead)
    return pl.pallas_call(
        kernel,
        out_shape=jax.ShapeDtypeStruct((B, S, D), x.dtype),
        grid=(B,),
        in_specs=in_specs,
        out_specs=out_specs,
        compiler_params=pltpu.CompilerParams(
            dimension_semantics=("parallel",),
            vmem_limit_bytes=vmem_limit,
        ),
        cost_estimate=cost,
    )(
        x,
        params["wq"].astype(bf16), params["wk"].astype(bf16),
        params["wv"].astype(bf16), params["wo"].astype(bf16),
        params["bq"], params["bk"], params["bv"], params["bo"],
        params["g1"], params["be1"],
        params["w1"].astype(bf16), params["b1"],
        params["w2"].astype(bf16), params["b2"],
        params["g2"], params["be2"],
    )


def reference_jax(x, params, nhead):
    """Pure-JAX mirror of the kernel math (bf16 MXU operands, f32 accumulate)."""
    bf, f32 = jnp.bfloat16, jnp.float32
    B, S, D = x.shape
    hd = D // nhead
    scale = 1.0 / math.sqrt(hd)
    wq, wk, wv, wo = (params[k].astype(bf) for k in ("wq", "wk", "wv", "wo"))
    w1, w2 = params["w1"].astype(bf), params["w2"].astype(bf)

    xb = x.astype(bf)
    q = jnp.einsum("bsd,de->bse", xb, wq, preferred_element_type=f32) + params["bq"]
    k = jnp.einsum("bsd,de->bse", xb, wk, preferred_element_type=f32) + params["bk"]
    v = jnp.einsum("bsd,de->bse", xb, wv, preferred_element_type=f32) + params["bv"]
    qh = q.reshape(B, S, nhead, hd).transpose(0, 2, 1, 3).astype(bf)
    kh = k.reshape(B, S, nhead, hd).transpose(0, 2, 1, 3).astype(bf)
    vh = v.reshape(B, S, nhead, hd).transpose(0, 2, 1, 3).astype(bf)
    s = jnp.einsum("bhqd,bhkd->bhqk", qh, kh, preferred_element_type=f32) * scale
    p = jax.nn.softmax(s, axis=-1)
    attn = jnp.einsum("bhqk,bhkd->bhqd", p.astype(bf), vh, preferred_element_type=f32)
    attn = attn.transpose(0, 2, 1, 3).reshape(B, S, D)
    attn = jnp.einsum("bsd,de->bse", attn.astype(bf), wo,
                      preferred_element_type=f32) + params["bo"]
    y = _layer_norm(x + attn, params["g1"], params["be1"])
    h1 = _gelu(jnp.einsum("bsd,df->bsf", y.astype(bf), w1,
                          preferred_element_type=f32) + params["b1"])
    z = jnp.einsum("bsf,fd->bsd", h1.astype(bf), w2,
                   preferred_element_type=f32) + params["b2"]
    return _layer_norm(y + z, params["g2"], params["be2"])


def make_params(key, d_model, dim_feedforward):
    ks = jax.random.split(key, 8)
    n = lambda k, shp: (jax.random.normal(k, shp, jnp.float32) * 0.05)
    D, Fd = d_model, dim_feedforward
    return {
        "wq": n(ks[0], (D, D)), "bq": n(ks[1], (1, D)),
        "wk": n(ks[2], (D, D)), "bk": n(ks[3], (1, D)),
        "wv": n(ks[4], (D, D)), "bv": n(ks[5], (1, D)),
        "wo": n(ks[6], (D, D)), "bo": jnp.zeros((1, D), jnp.float32),
        "g1": jnp.ones((1, D), jnp.float32), "be1": jnp.zeros((1, D), jnp.float32),
        "w1": n(ks[7], (D, Fd)), "b1": jnp.zeros((1, Fd), jnp.float32),
        "w2": n(jax.random.fold_in(key, 99), (Fd, D)), "b2": jnp.zeros((1, D), jnp.float32),
        "g2": jnp.ones((1, D), jnp.float32), "be2": jnp.zeros((1, D), jnp.float32),
    }


if __name__ == "__main__":
    B, S, D, H, FF = 2, 8, 32, 4, 64
    key = jax.random.PRNGKey(0)
    kx, kp = jax.random.split(key)
    x = jax.random.normal(kx, (B, S, D), jnp.float32)
    params = make_params(kp, D, FF)

    out = transformer_encoder_layer(x, params, nhead=H)
    out = jax.block_until_ready(out)

    ref = reference_jax(x, params, H)
    assert out.shape == (B, S, D)
    # Tolerance covers approx-reciprocal softmax and bf16 accumulation-order diffs.
    assert jnp.allclose(out, ref, atol=2e-2, rtol=2e-2), "mismatch vs JAX reference"
    print("KERNEL_OK")
</pallas_src>

<mosaic_0001>
module attributes {stable_mosaic.version = 11 : i64} {
  func.func @encoder_layer_kernel(%arg0: i32, %arg1: memref<1x8x32xf32, #tpu.memory_space<vmem>>, %arg2: memref<32x32xbf16, #tpu.memory_space<vmem>>, %arg3: memref<32x32xbf16, #tpu.memory_space<vmem>>, %arg4: memref<32x32xbf16, #tpu.memory_space<vmem>>, %arg5: memref<32x32xbf16, #tpu.memory_space<vmem>>, %arg6: memref<1x32xf32, #tpu.memory_space<vmem>>, %arg7: memref<1x32xf32, #tpu.memory_space<vmem>>, %arg8: memref<1x32xf32, #tpu.memory_space<vmem>>, %arg9: memref<1x32xf32, #tpu.memory_space<vmem>>, %arg10: memref<1x32xf32, #tpu.memory_space<vmem>>, %arg11: memref<1x32xf32, #tpu.memory_space<vmem>>, %arg12: memref<32x64xbf16, #tpu.memory_space<vmem>>, %arg13: memref<1x64xf32, #tpu.memory_space<vmem>>, %arg14: memref<64x32xbf16, #tpu.memory_space<vmem>>, %arg15: memref<1x32xf32, #tpu.memory_space<vmem>>, %arg16: memref<1x32xf32, #tpu.memory_space<vmem>>, %arg17: memref<1x32xf32, #tpu.memory_space<vmem>>, %arg18: memref<1x8x32xf32, #tpu.memory_space<vmem>>) attributes {dimension_semantics = [#tpu.dimension_semantics<parallel>], iteration_bounds = array<i64: 2>, scalar_prefetch = 0 : i64, scratch_operands = 0 : i64, tpu.core_type = #tpu.core_type<tc>, window_params = [{transform_indices = @transform_0, window_bounds = array<i64: 1, 8, 32>}, {pipeline_mode = #tpu.pipeline_mode<synchronous>, transform_indices = @transform_1, window_bounds = array<i64: 32, 32>}, {pipeline_mode = #tpu.pipeline_mode<synchronous>, transform_indices = @transform_2, window_bounds = array<i64: 32, 32>}, {pipeline_mode = #tpu.pipeline_mode<synchronous>, transform_indices = @transform_3, window_bounds = array<i64: 32, 32>}, {pipeline_mode = #tpu.pipeline_mode<synchronous>, transform_indices = @transform_4, window_bounds = array<i64: 32, 32>}, {pipeline_mode = #tpu.pipeline_mode<synchronous>, transform_indices = @transform_5, window_bounds = array<i64: 1, 32>}, {pipeline_mode = #tpu.pipeline_mode<synchronous>, transform_indices = @transform_6, window_bounds = array<i64: 1, 32>}, {pipeline_mode = #tpu.pipeline_mode<synchronous>, transform_indices = @transform_7, window_bounds = array<i64: 1, 32>}, {pipeline_mode = #tpu.pipeline_mode<synchronous>, transform_indices = @transform_8, window_bounds = array<i64: 1, 32>}, {pipeline_mode = #tpu.pipeline_mode<synchronous>, transform_indices = @transform_9, window_bounds = array<i64: 1, 32>}, {pipeline_mode = #tpu.pipeline_mode<synchronous>, transform_indices = @transform_10, window_bounds = array<i64: 1, 32>}, {pipeline_mode = #tpu.pipeline_mode<synchronous>, transform_indices = @transform_11, window_bounds = array<i64: 32, 64>}, {pipeline_mode = #tpu.pipeline_mode<synchronous>, transform_indices = @transform_12, window_bounds = array<i64: 1, 64>}, {pipeline_mode = #tpu.pipeline_mode<synchronous>, transform_indices = @transform_13, window_bounds = array<i64: 64, 32>}, {pipeline_mode = #tpu.pipeline_mode<synchronous>, transform_indices = @transform_14, window_bounds = array<i64: 1, 32>}, {pipeline_mode = #tpu.pipeline_mode<synchronous>, transform_indices = @transform_15, window_bounds = array<i64: 1, 32>}, {pipeline_mode = #tpu.pipeline_mode<synchronous>, transform_indices = @transform_16, window_bounds = array<i64: 1, 32>}, {transform_indices = @transform_17, window_bounds = array<i64: 1, 8, 32>}]} {
    %c0 = arith.constant 0 : index
    %c0_0 = arith.constant 0 : index
    %c0_1 = arith.constant 0 : index
    %0 = vector.load %arg1[%c0, %c0_0, %c0_1] : memref<1x8x32xf32, #tpu.memory_space<vmem>>, vector<1x8x32xf32>
    %1 = vector.shape_cast %0 : vector<1x8x32xf32> to vector<8x32xf32>
    %2 = arith.truncf %1 : vector<8x32xf32> to vector<8x32xbf16>
    %c0_2 = arith.constant 0 : index
    %c0_3 = arith.constant 0 : index
    %3 = vector.load %arg2[%c0_2, %c0_3] : memref<32x32xbf16, #tpu.memory_space<vmem>>, vector<32x32xbf16>
    %cst = arith.constant dense<0.000000e+00> : vector<8x32xf32>
    %4 = tpu.matmul %2, %3, %cst {dimension_numbers = #tpu.dot_dimension_numbers<[1], [0], [0], [1], [0, 0, 1, 1], [], []>} : vector<8x32xbf16>, vector<32x32xbf16>, vector<8x32xf32> -> vector<8x32xf32>
    %c0_4 = arith.constant 0 : index
    %c0_5 = arith.constant 0 : index
    %5 = vector.load %arg6[%c0_4, %c0_5] : memref<1x32xf32, #tpu.memory_space<vmem>>, vector<1x32xf32>
    %6 = vector.broadcast %5 : vector<1x32xf32> to vector<8x32xf32>
    %7 = arith.addf %4, %6 : vector<8x32xf32>
    %c0_6 = arith.constant 0 : index
    %c0_7 = arith.constant 0 : index
    %8 = vector.load %arg3[%c0_6, %c0_7] : memref<32x32xbf16, #tpu.memory_space<vmem>>, vector<32x32xbf16>
    %cst_8 = arith.constant dense<0.000000e+00> : vector<8x32xf32>
    %9 = tpu.matmul %2, %8, %cst_8 {dimension_numbers = #tpu.dot_dimension_numbers<[1], [0], [0], [1], [0, 0, 1, 1], [], []>} : vector<8x32xbf16>, vector<32x32xbf16>, vector<8x32xf32> -> vector<8x32xf32>
    %c0_9 = arith.constant 0 : index
    %c0_10 = arith.constant 0 : index
    %10 = vector.load %arg7[%c0_9, %c0_10] : memref<1x32xf32, #tpu.memory_space<vmem>>, vector<1x32xf32>
    %11 = vector.broadcast %10 : vector<1x32xf32> to vector<8x32xf32>
    %12 = arith.addf %9, %11 : vector<8x32xf32>
    %c0_11 = arith.constant 0 : index
    %c0_12 = arith.constant 0 : index
    %13 = vector.load %arg4[%c0_11, %c0_12] : memref<32x32xbf16, #tpu.memory_space<vmem>>, vector<32x32xbf16>
    %cst_13 = arith.constant dense<0.000000e+00> : vector<8x32xf32>
    %14 = tpu.matmul %2, %13, %cst_13 {dimension_numbers = #tpu.dot_dimension_numbers<[1], [0], [0], [1], [0, 0, 1, 1], [], []>} : vector<8x32xbf16>, vector<32x32xbf16>, vector<8x32xf32> -> vector<8x32xf32>
    %c0_14 = arith.constant 0 : index
    %c0_15 = arith.constant 0 : index
    %15 = vector.load %arg8[%c0_14, %c0_15] : memref<1x32xf32, #tpu.memory_space<vmem>>, vector<1x32xf32>
    %16 = vector.broadcast %15 : vector<1x32xf32> to vector<8x32xf32>
    %17 = arith.addf %14, %16 : vector<8x32xf32>
    %18 = arith.truncf %7 : vector<8x32xf32> to vector<8x32xbf16>
    %19 = arith.truncf %12 : vector<8x32xf32> to vector<8x32xbf16>
    %20 = arith.truncf %17 : vector<8x32xf32> to vector<8x32xbf16>
    %cst_16 = arith.constant 0.000000e+00 : f32
    %21 = vector.broadcast %cst_16 : f32 to vector<8x32xf32>
    %22 = vector.extract_strided_slice %18 {offsets = [0, 0], sizes = [8, 8], strides = [1, 1]} : vector<8x32xbf16> to vector<8x8xbf16>
    %23 = vector.extract_strided_slice %19 {offsets = [0, 0], sizes = [8, 8], strides = [1, 1]} : vector<8x32xbf16> to vector<8x8xbf16>
    %24 = vector.extract_strided_slice %20 {offsets = [0, 0], sizes = [8, 8], strides = [1, 1]} : vector<8x32xbf16> to vector<8x8xbf16>
    %cst_17 = arith.constant dense<0.000000e+00> : vector<8x8xf32>
    %25 = tpu.matmul %22, %23, %cst_17 {dimension_numbers = #tpu.dot_dimension_numbers<[1], [1], [0], [0], [0, 0, 1, 0], [], []>} : vector<8x8xbf16>, vector<8x8xbf16>, vector<8x8xf32> -> vector<8x8xf32>
    %cst_18 = arith.constant 0.353553385 : f32
    %26 = vector.broadcast %cst_18 : f32 to vector<8x8xf32>
    %27 = arith.mulf %25, %26 : vector<8x8xf32>
    %cst_19 = arith.constant dense<0xFF800000> : vector<8xf32>
    %28 = vector.multi_reduction <maximumf>, %27, %cst_19 [1] : vector<8x8xf32> to vector<8xf32>
    %29 = vector.shape_cast %28 : vector<8xf32> to vector<8x1xf32>
    %30 = vector.broadcast %29 : vector<8x1xf32> to vector<8x8xf32>
    %31 = arith.subf %27, %30 : vector<8x8xf32>
    %32 = math.exp %31 : vector<8x8xf32>
    %cst_20 = arith.constant dense<0.000000e+00> : vector<8xf32>
    %33 = vector.multi_reduction <add>, %32, %cst_20 [1] : vector<8x8xf32> to vector<8xf32>
    %34 = vector.shape_cast %33 : vector<8xf32> to vector<8x1xf32>
    %35 = tpu.reciprocal %34 {approx = true} : vector<8x1xf32> -> vector<8x1xf32>
    %36 = vector.broadcast %35 : vector<8x1xf32> to vector<8x8xf32>
    %37 = arith.mulf %32, %36 : vector<8x8xf32>
    %38 = arith.truncf %37 : vector<8x8xf32> to vector<8x8xbf16>
    %cst_21 = arith.constant dense<0.000000e+00> : vector<8x8xf32>
    %39 = tpu.matmul %38, %24, %cst_21 {dimension_numbers = #tpu.dot_dimension_numbers<[1], [0], [0], [1], [0, 0, 1, 1], [], []>} : vector<8x8xbf16>, vector<8x8xbf16>, vector<8x8xf32> -> vector<8x8xf32>
    %40 = arith.truncf %39 : vector<8x8xf32> to vector<8x8xbf16>
    %c0_22 = arith.constant 0 : index
    %c0_23 = arith.constant 0 : index
    %41 = vector.load %arg5[%c0_22, %c0_23] : memref<32x32xbf16, #tpu.memory_space<vmem>>, vector<8x32xbf16>
    %cst_24 = arith.constant dense<0.000000e+00> : vector<8x32xf32>
    %42 = tpu.matmul %40, %41, %cst_24 {dimension_numbers = #tpu.dot_dimension_numbers<[1], [0], [0], [1], [0, 0, 1, 1], [], []>} : vector<8x8xbf16>, vector<8x32xbf16>, vector<8x32xf32> -> vector<8x32xf32>
    %43 = arith.addf %21, %42 : vector<8x32xf32>
    %44 = vector.extract_strided_slice %18 {offsets = [0, 8], sizes = [8, 8], strides = [1, 1]} : vector<8x32xbf16> to vector<8x8xbf16>
    %45 = vector.extract_strided_slice %19 {offsets = [0, 8], sizes = [8, 8], strides = [1, 1]} : vector<8x32xbf16> to vector<8x8xbf16>
    %46 = vector.extract_strided_slice %20 {offsets = [0, 8], sizes = [8, 8], strides = [1, 1]} : vector<8x32xbf16> to vector<8x8xbf16>
    %cst_25 = arith.constant dense<0.000000e+00> : vector<8x8xf32>
    %47 = tpu.matmul %44, %45, %cst_25 {dimension_numbers = #tpu.dot_dimension_numbers<[1], [1], [0], [0], [0, 0, 1, 0], [], []>} : vector<8x8xbf16>, vector<8x8xbf16>, vector<8x8xf32> -> vector<8x8xf32>
    %cst_26 = arith.constant 0.353553385 : f32
    %48 = vector.broadcast %cst_26 : f32 to vector<8x8xf32>
    %49 = arith.mulf %47, %48 : vector<8x8xf32>
    %cst_27 = arith.constant dense<0xFF800000> : vector<8xf32>
    %50 = vector.multi_reduction <maximumf>, %49, %cst_27 [1] : vector<8x8xf32> to vector<8xf32>
    %51 = vector.shape_cast %50 : vector<8xf32> to vector<8x1xf32>
    %52 = vector.broadcast %51 : vector<8x1xf32> to vector<8x8xf32>
    %53 = arith.subf %49, %52 : vector<8x8xf32>
    %54 = math.exp %53 : vector<8x8xf32>
    %cst_28 = arith.constant dense<0.000000e+00> : vector<8xf32>
    %55 = vector.multi_reduction <add>, %54, %cst_28 [1] : vector<8x8xf32> to vector<8xf32>
    %56 = vector.shape_cast %55 : vector<8xf32> to vector<8x1xf32>
    %57 = tpu.reciprocal %56 {approx = true} : vector<8x1xf32> -> vector<8x1xf32>
    %58 = vector.broadcast %57 : vector<8x1xf32> to vector<8x8xf32>
    %59 = arith.mulf %54, %58 : vector<8x8xf32>
    %60 = arith.truncf %59 : vector<8x8xf32> to vector<8x8xbf16>
    %cst_29 = arith.constant dense<0.000000e+00> : vector<8x8xf32>
    %61 = tpu.matmul %60, %46, %cst_29 {dimension_numbers = #tpu.dot_dimension_numbers<[1], [0], [0], [1], [0, 0, 1, 1], [], []>} : vector<8x8xbf16>, vector<8x8xbf16>, vector<8x8xf32> -> vector<8x8xf32>
    %62 = arith.truncf %61 : vector<8x8xf32> to vector<8x8xbf16>
    %c8 = arith.constant 8 : index
    %c0_30 = arith.constant 0 : index
    %63 = vector.load %arg5[%c8, %c0_30] : memref<32x32xbf16, #tpu.memory_space<vmem>>, vector<8x32xbf16>
    %cst_31 = arith.constant dense<0.000000e+00> : vector<8x32xf32>
    %64 = tpu.matmul %62, %63, %cst_31 {dimension_numbers = #tpu.dot_dimension_numbers<[1], [0], [0], [1], [0, 0, 1, 1], [], []>} : vector<8x8xbf16>, vector<8x32xbf16>, vector<8x32xf32> -> vector<8x32xf32>
    %65 = arith.addf %43, %64 : vector<8x32xf32>
    %66 = vector.extract_strided_slice %18 {offsets = [0, 16], sizes = [8, 8], strides = [1, 1]} : vector<8x32xbf16> to vector<8x8xbf16>
    %67 = vector.extract_strided_slice %19 {offsets = [0, 16], sizes = [8, 8], strides = [1, 1]} : vector<8x32xbf16> to vector<8x8xbf16>
    %68 = vector.extract_strided_slice %20 {offsets = [0, 16], sizes = [8, 8], strides = [1, 1]} : vector<8x32xbf16> to vector<8x8xbf16>
    %cst_32 = arith.constant dense<0.000000e+00> : vector<8x8xf32>
    %69 = tpu.matmul %66, %67, %cst_32 {dimension_numbers = #tpu.dot_dimension_numbers<[1], [1], [0], [0], [0, 0, 1, 0], [], []>} : vector<8x8xbf16>, vector<8x8xbf16>, vector<8x8xf32> -> vector<8x8xf32>
    %cst_33 = arith.constant 0.353553385 : f32
    %70 = vector.broadcast %cst_33 : f32 to vector<8x8xf32>
    %71 = arith.mulf %69, %70 : vector<8x8xf32>
    %cst_34 = arith.constant dense<0xFF800000> : vector<8xf32>
    %72 = vector.multi_reduction <maximumf>, %71, %cst_34 [1] : vector<8x8xf32> to vector<8xf32>
    %73 = vector.shape_cast %72 : vector<8xf32> to vector<8x1xf32>
    %74 = vector.broadcast %73 : vector<8x1xf32> to vector<8x8xf32>
    %75 = arith.subf %71, %74 : vector<8x8xf32>
    %76 = math.exp %75 : vector<8x8xf32>
    %cst_35 = arith.constant dense<0.000000e+00> : vector<8xf32>
    %77 = vector.multi_reduction <add>, %76, %cst_35 [1] : vector<8x8xf32> to vector<8xf32>
    %78 = vector.shape_cast %77 : vector<8xf32> to vector<8x1xf32>
    %79 = tpu.reciprocal %78 {approx = true} : vector<8x1xf32> -> vector<8x1xf32>
    %80 = vector.broadcast %79 : vector<8x1xf32> to vector<8x8xf32>
    %81 = arith.mulf %76, %80 : vector<8x8xf32>
    %82 = arith.truncf %81 : vector<8x8xf32> to vector<8x8xbf16>
    %cst_36 = arith.constant dense<0.000000e+00> : vector<8x8xf32>
    %83 = tpu.matmul %82, %68, %cst_36 {dimension_numbers = #tpu.dot_dimension_numbers<[1], [0], [0], [1], [0, 0, 1, 1], [], []>} : vector<8x8xbf16>, vector<8x8xbf16>, vector<8x8xf32> -> vector<8x8xf32>
    %84 = arith.truncf %83 : vector<8x8xf32> to vector<8x8xbf16>
    %c16 = arith.constant 16 : index
    %c0_37 = arith.constant 0 : index
    %85 = vector.load %arg5[%c16, %c0_37] : memref<32x32xbf16, #tpu.memory_space<vmem>>, vector<8x32xbf16>
    %cst_38 = arith.constant dense<0.000000e+00> : vector<8x32xf32>
    %86 = tpu.matmul %84, %85, %cst_38 {dimension_numbers = #tpu.dot_dimension_numbers<[1], [0], [0], [1], [0, 0, 1, 1], [], []>} : vector<8x8xbf16>, vector<8x32xbf16>, vector<8x32xf32> -> vector<8x32xf32>
    %87 = arith.addf %65, %86 : vector<8x32xf32>
    %88 = vector.extract_strided_slice %18 {offsets = [0, 24], sizes = [8, 8], strides = [1, 1]} : vector<8x32xbf16> to vector<8x8xbf16>
    %89 = vector.extract_strided_slice %19 {offsets = [0, 24], sizes = [8, 8], strides = [1, 1]} : vector<8x32xbf16> to vector<8x8xbf16>
    %90 = vector.extract_strided_slice %20 {offsets = [0, 24], sizes = [8, 8], strides = [1, 1]} : vector<8x32xbf16> to vector<8x8xbf16>
    %cst_39 = arith.constant dense<0.000000e+00> : vector<8x8xf32>
    %91 = tpu.matmul %88, %89, %cst_39 {dimension_numbers = #tpu.dot_dimension_numbers<[1], [1], [0], [0], [0, 0, 1, 0], [], []>} : vector<8x8xbf16>, vector<8x8xbf16>, vector<8x8xf32> -> vector<8x8xf32>
    %cst_40 = arith.constant 0.353553385 : f32
    %92 = vector.broadcast %cst_40 : f32 to vector<8x8xf32>
    %93 = arith.mulf %91, %92 : vector<8x8xf32>
    %cst_41 = arith.constant dense<0xFF800000> : vector<8xf32>
    %94 = vector.multi_reduction <maximumf>, %93, %cst_41 [1] : vector<8x8xf32> to vector<8xf32>
    %95 = vector.shape_cast %94 : vector<8xf32> to vector<8x1xf32>
    %96 = vector.broadcast %95 : vector<8x1xf32> to vector<8x8xf32>
    %97 = arith.subf %93, %96 : vector<8x8xf32>
    %98 = math.exp %97 : vector<8x8xf32>
    %cst_42 = arith.constant dense<0.000000e+00> : vector<8xf32>
    %99 = vector.multi_reduction <add>, %98, %cst_42 [1] : vector<8x8xf32> to vector<8xf32>
    %100 = vector.shape_cast %99 : vector<8xf32> to vector<8x1xf32>
    %101 = tpu.reciprocal %100 {approx = true} : vector<8x1xf32> -> vector<8x1xf32>
    %102 = vector.broadcast %101 : vector<8x1xf32> to vector<8x8xf32>
    %103 = arith.mulf %98, %102 : vector<8x8xf32>
    %104 = arith.truncf %103 : vector<8x8xf32> to vector<8x8xbf16>
    %cst_43 = arith.constant dense<0.000000e+00> : vector<8x8xf32>
    %105 = tpu.matmul %104, %90, %cst_43 {dimension_numbers = #tpu.dot_dimension_numbers<[1], [0], [0], [1], [0, 0, 1, 1], [], []>} : vector<8x8xbf16>, vector<8x8xbf16>, vector<8x8xf32> -> vector<8x8xf32>
    %106 = arith.truncf %105 : vector<8x8xf32> to vector<8x8xbf16>
    %c24 = arith.constant 24 : index
    %c0_44 = arith.constant 0 : index
    %107 = vector.load %arg5[%c24, %c0_44] : memref<32x32xbf16, #tpu.memory_space<vmem>>, vector<8x32xbf16>
    %cst_45 = arith.constant dense<0.000000e+00> : vector<8x32xf32>
    %108 = tpu.matmul %106, %107, %cst_45 {dimension_numbers = #tpu.dot_dimension_numbers<[1], [0], [0], [1], [0, 0, 1, 1], [], []>} : vector<8x8xbf16>, vector<8x32xbf16>, vector<8x32xf32> -> vector<8x32xf32>
    %109 = arith.addf %87, %108 : vector<8x32xf32>
    %c0_46 = arith.constant 0 : index
    %c0_47 = arith.constant 0 : index
    %110 = vector.load %arg9[%c0_46, %c0_47] : memref<1x32xf32, #tpu.memory_space<vmem>>, vector<1x32xf32>
    %111 = vector.broadcast %110 : vector<1x32xf32> to vector<8x32xf32>
    %112 = arith.addf %109, %111 : vector<8x32xf32>
    %113 = arith.addf %1, %112 : vector<8x32xf32>
    %c0_48 = arith.constant 0 : index
    %c0_49 = arith.constant 0 : index
    %114 = vector.load %arg10[%c0_48, %c0_49] : memref<1x32xf32, #tpu.memory_space<vmem>>, vector<1x32xf32>
    %c0_50 = arith.constant 0 : index
    %c0_51 = arith.constant 0 : index
    %115 = vector.load %arg11[%c0_50, %c0_51] : memref<1x32xf32, #tpu.memory_space<vmem>>, vector<1x32xf32>
    %cst_52 = arith.constant dense<0.000000e+00> : vector<8xf32>
    %116 = vector.multi_reduction <add>, %113, %cst_52 [1] : vector<8x32xf32> to vector<8xf32>
    %117 = vector.shape_cast %116 : vector<8xf32> to vector<8x1xf32>
    %cst_53 = arith.constant 3.200000e+01 : f32
    %118 = vector.broadcast %cst_53 : f32 to vector<8x1xf32>
    %119 = arith.divf %117, %118 : vector<8x1xf32>
    %120 = vector.broadcast %119 : vector<8x1xf32> to vector<8x32xf32>
    %121 = arith.subf %113, %120 : vector<8x32xf32>
    %122 = arith.mulf %121, %121 : vector<8x32xf32>
    %cst_54 = arith.constant dense<0.000000e+00> : vector<8xf32>
    %123 = vector.multi_reduction <add>, %122, %cst_54 [1] : vector<8x32xf32> to vector<8xf32>
    %124 = vector.shape_cast %123 : vector<8xf32> to vector<8x1xf32>
    %cst_55 = arith.constant 3.200000e+01 : f32
    %125 = vector.broadcast %cst_55 : f32 to vector<8x1xf32>
    %126 = arith.divf %124, %125 : vector<8x1xf32>
    %127 = vector.broadcast %119 : vector<8x1xf32> to vector<8x32xf32>
    %128 = arith.subf %113, %127 : vector<8x32xf32>
    %cst_56 = arith.constant 9.99999974E-6 : f32
    %129 = vector.broadcast %cst_56 : f32 to vector<8x1xf32>
    %130 = arith.addf %126, %129 : vector<8x1xf32>
    %131 = math.rsqrt %130 : vector<8x1xf32>
    %132 = vector.broadcast %131 : vector<8x1xf32> to vector<8x32xf32>
    %133 = arith.mulf %128, %132 : vector<8x32xf32>
    %134 = vector.broadcast %114 : vector<1x32xf32> to vector<8x32xf32>
    %135 = arith.mulf %133, %134 : vector<8x32xf32>
    %136 = vector.broadcast %115 : vector<1x32xf32> to vector<8x32xf32>
    %137 = arith.addf %135, %136 : vector<8x32xf32>
    %138 = arith.truncf %137 : vector<8x32xf32> to vector<8x32xbf16>
    %c0_57 = arith.constant 0 : index
    %c0_58 = arith.constant 0 : index
    %139 = vector.load %arg12[%c0_57, %c0_58] : memref<32x64xbf16, #tpu.memory_space<vmem>>, vector<32x64xbf16>
    %cst_59 = arith.constant dense<0.000000e+00> : vector<8x64xf32>
    %140 = tpu.matmul %138, %139, %cst_59 {dimension_numbers = #tpu.dot_dimension_numbers<[1], [0], [0], [1], [0, 0, 1, 1], [], []>} : vector<8x32xbf16>, vector<32x64xbf16>, vector<8x64xf32> -> vector<8x64xf32>
    %c0_60 = arith.constant 0 : index
    %c0_61 = arith.constant 0 : index
    %141 = vector.load %arg13[%c0_60, %c0_61] : memref<1x64xf32, #tpu.memory_space<vmem>>, vector<1x64xf32>
    %142 = vector.broadcast %141 : vector<1x64xf32> to vector<8x64xf32>
    %143 = arith.addf %140, %142 : vector<8x64xf32>
    %cst_62 = arith.constant 5.000000e-01 : f32
    %144 = vector.broadcast %cst_62 : f32 to vector<8x64xf32>
    %145 = arith.mulf %144, %143 : vector<8x64xf32>
    %cst_63 = arith.constant 4.471500e-02 : f32
    %146 = vector.broadcast %cst_63 : f32 to vector<8x64xf32>
    %147 = arith.mulf %146, %143 : vector<8x64xf32>
    %148 = arith.mulf %147, %143 : vector<8x64xf32>
    %149 = arith.mulf %148, %143 : vector<8x64xf32>
    %150 = arith.addf %143, %149 : vector<8x64xf32>
    %cst_64 = arith.constant 0.797884583 : f32
    %151 = vector.broadcast %cst_64 : f32 to vector<8x64xf32>
    %152 = arith.mulf %151, %150 : vector<8x64xf32>
    %153 = math.tanh %152 : vector<8x64xf32>
    %cst_65 = arith.constant 1.000000e+00 : f32
    %154 = vector.broadcast %cst_65 : f32 to vector<8x64xf32>
    %155 = arith.addf %154, %153 : vector<8x64xf32>
    %156 = arith.mulf %145, %155 : vector<8x64xf32>
    %157 = arith.truncf %156 : vector<8x64xf32> to vector<8x64xbf16>
    %c0_66 = arith.constant 0 : index
    %c0_67 = arith.constant 0 : index
    %158 = vector.load %arg14[%c0_66, %c0_67] : memref<64x32xbf16, #tpu.memory_space<vmem>>, vector<64x32xbf16>
    %cst_68 = arith.constant dense<0.000000e+00> : vector<8x32xf32>
    %159 = tpu.matmul %157, %158, %cst_68 {dimension_numbers = #tpu.dot_dimension_numbers<[1], [0], [0], [1], [0, 0, 1, 1], [], []>} : vector<8x64xbf16>, vector<64x32xbf16>, vector<8x32xf32> -> vector<8x32xf32>
    %c0_69 = arith.constant 0 : index
    %c0_70 = arith.constant 0 : index
    %160 = vector.load %arg15[%c0_69, %c0_70] : memref<1x32xf32, #tpu.memory_space<vmem>>, vector<1x32xf32>
    %161 = vector.broadcast %160 : vector<1x32xf32> to vector<8x32xf32>
    %162 = arith.addf %159, %161 : vector<8x32xf32>
    %163 = arith.addf %137, %162 : vector<8x32xf32>
    %c0_71 = arith.constant 0 : index
    %c0_72 = arith.constant 0 : index
    %164 = vector.load %arg16[%c0_71, %c0_72] : memref<1x32xf32, #tpu.memory_space<vmem>>, vector<1x32xf32>
    %c0_73 = arith.constant 0 : index
    %c0_74 = arith.constant 0 : index
    %165 = vector.load %arg17[%c0_73, %c0_74] : memref<1x32xf32, #tpu.memory_space<vmem>>, vector<1x32xf32>
    %cst_75 = arith.constant dense<0.000000e+00> : vector<8xf32>
    %166 = vector.multi_reduction <add>, %163, %cst_75 [1] : vector<8x32xf32> to vector<8xf32>
    %167 = vector.shape_cast %166 : vector<8xf32> to vector<8x1xf32>
    %cst_76 = arith.constant 3.200000e+01 : f32
    %168 = vector.broadcast %cst_76 : f32 to vector<8x1xf32>
    %169 = arith.divf %167, %168 : vector<8x1xf32>
    %170 = vector.broadcast %169 : vector<8x1xf32> to vector<8x32xf32>
    %171 = arith.subf %163, %170 : vector<8x32xf32>
    %172 = arith.mulf %171, %171 : vector<8x32xf32>
    %cst_77 = arith.constant dense<0.000000e+00> : vector<8xf32>
    %173 = vector.multi_reduction <add>, %172, %cst_77 [1] : vector<8x32xf32> to vector<8xf32>
    %174 = vector.shape_cast %173 : vector<8xf32> to vector<8x1xf32>
    %cst_78 = arith.constant 3.200000e+01 : f32
    %175 = vector.broadcast %cst_78 : f32 to vector<8x1xf32>
    %176 = arith.divf %174, %175 : vector<8x1xf32>
    %177 = vector.broadcast %169 : vector<8x1xf32> to vector<8x32xf32>
    %178 = arith.subf %163, %177 : vector<8x32xf32>
    %cst_79 = arith.constant 9.99999974E-6 : f32
    %179 = vector.broadcast %cst_79 : f32 to vector<8x1xf32>
    %180 = arith.addf %176, %179 : vector<8x1xf32>
    %181 = math.rsqrt %180 : vector<8x1xf32>
    %182 = vector.broadcast %181 : vector<8x1xf32> to vector<8x32xf32>
    %183 = arith.mulf %178, %182 : vector<8x32xf32>
    %184 = vector.broadcast %164 : vector<1x32xf32> to vector<8x32xf32>
    %185 = arith.mulf %183, %184 : vector<8x32xf32>
    %186 = vector.broadcast %165 : vector<1x32xf32> to vector<8x32xf32>
    %187 = arith.addf %185, %186 : vector<8x32xf32>
    %c0_80 = arith.constant 0 : index
    %c0_81 = arith.constant 0 : index
    %c0_82 = arith.constant 0 : index
    %188 = vector.load %arg18[%c0_80, %c0_81, %c0_82] : memref<1x8x32xf32, #tpu.memory_space<vmem>>, vector<1x8x32xf32>
    %189 = vector.shape_cast %188 : vector<1x8x32xf32> to vector<8x32xf32>
    %190 = vector.shape_cast %187 : vector<8x32xf32> to vector<1x8x32xf32>
    tpu.vector_store %arg18[%c0_80, %c0_81, %c0_82], %190 {strides = array<i32>} : memref<1x8x32xf32, #tpu.memory_space<vmem>>, vector<1x8x32xf32>,
    return
  }
  func.func @transform_0(%arg0: i32) -> (i32, i32, i32) {
    %c0_i32 = arith.constant 0 : i32
    %c0_i32_0 = arith.constant 0 : i32
    %c0_i32_1 = arith.constant 0 : i32
    return %arg0, %c0_i32, %c0_i32_0 : i32, i32, i32
  }
  func.func @transform_1(%arg0: i32) -> (i32, i32) {
    %c0_i32 = arith.constant 0 : i32
    %c0_i32_0 = arith.constant 0 : i32
    %c0_i32_1 = arith.constant 0 : i32
    return %c0_i32, %c0_i32_0 : i32, i32
  }
  func.func @transform_2(%arg0: i32) -> (i32, i32) {
    %c0_i32 = arith.constant 0 : i32
    %c0_i32_0 = arith.constant 0 : i32
    %c0_i32_1 = arith.constant 0 : i32
    return %c0_i32, %c0_i32_0 : i32, i32
  }
  func.func @transform_3(%arg0: i32) -> (i32, i32) {
    %c0_i32 = arith.constant 0 : i32
    %c0_i32_0 = arith.constant 0 : i32
    %c0_i32_1 = arith.constant 0 : i32
    return %c0_i32, %c0_i32_0 : i32, i32
  }
  func.func @transform_4(%arg0: i32) -> (i32, i32) {
    %c0_i32 = arith.constant 0 : i32
    %c0_i32_0 = arith.constant 0 : i32
    %c0_i32_1 = arith.constant 0 : i32
    return %c0_i32, %c0_i32_0 : i32, i32
  }
  func.func @transform_5(%arg0: i32) -> (i32, i32) {
    %c0_i32 = arith.constant 0 : i32
    %c0_i32_0 = arith.constant 0 : i32
    %c0_i32_1 = arith.constant 0 : i32
    return %c0_i32, %c0_i32_0 : i32, i32
  }
  func.func @transform_6(%arg0: i32) -> (i32, i32) {
    %c0_i32 = arith.constant 0 : i32
    %c0_i32_0 = arith.constant 0 : i32
    %c0_i32_1 = arith.constant 0 : i32
    return %c0_i32, %c0_i32_0 : i32, i32
  }
  func.func @transform_7(%arg0: i32) -> (i32, i32) {
    %c0_i32 = arith.constant 0 : i32
    %c0_i32_0 = arith.constant 0 : i32
    %c0_i32_1 = arith.constant 0 : i32
    return %c0_i32, %c0_i32_0 : i32, i32
  }
  func.func @transform_8(%arg0: i32) -> (i32, i32) {
    %c0_i32 = arith.constant 0 : i32
    %c0_i32_0 = arith.constant 0 : i32
    %c0_i32_1 = arith.constant 0 : i32
    return %c0_i32, %c0_i32_0 : i32, i32
  }
  func.func @transform_9(%arg0: i32) -> (i32, i32) {
    %c0_i32 = arith.constant 0 : i32
    %c0_i32_0 = arith.constant 0 : i32
    %c0_i32_1 = arith.constant 0 : i32
    return %c0_i32, %c0_i32_0 : i32, i32
  }
  func.func @transform_10(%arg0: i32) -> (i32, i32) {
    %c0_i32 = arith.constant 0 : i32
    %c0_i32_0 = arith.constant 0 : i32
    %c0_i32_1 = arith.constant 0 : i32
    return %c0_i32, %c0_i32_0 : i32, i32
  }
  func.func @transform_11(%arg0: i32) -> (i32, i32) {
    %c0_i32 = arith.constant 0 : i32
    %c0_i32_0 = arith.constant 0 : i32
    %c0_i32_1 = arith.constant 0 : i32
    return %c0_i32, %c0_i32_0 : i32, i32
  }
  func.func @transform_12(%arg0: i32) -> (i32, i32) {
    %c0_i32 = arith.constant 0 : i32
    %c0_i32_0 = arith.constant 0 : i32
    %c0_i32_1 = arith.constant 0 : i32
    return %c0_i32, %c0_i32_0 : i32, i32
  }
  func.func @transform_13(%arg0: i32) -> (i32, i32) {
    %c0_i32 = arith.constant 0 : i32
    %c0_i32_0 = arith.constant 0 : i32
    %c0_i32_1 = arith.constant 0 : i32
    return %c0_i32, %c0_i32_0 : i32, i32
  }
  func.func @transform_14(%arg0: i32) -> (i32, i32) {
    %c0_i32 = arith.constant 0 : i32
    %c0_i32_0 = arith.constant 0 : i32
    %c0_i32_1 = arith.constant 0 : i32
    return %c0_i32, %c0_i32_0 : i32, i32
  }
  func.func @transform_15(%arg0: i32) -> (i32, i32) {
    %c0_i32 = arith.constant 0 : i32
    %c0_i32_0 = arith.constant 0 : i32
    %c0_i32_1 = arith.constant 0 : i32
    return %c0_i32, %c0_i32_0 : i32, i32
  }
  func.func @transform_16(%arg0: i32) -> (i32, i32) {
    %c0_i32 = arith.constant 0 : i32
    %c0_i32_0 = arith.constant 0 : i32
    %c0_i32_1 = arith.constant 0 : i32
    return %c0_i32, %c0_i32_0 : i32, i32
  }
  func.func @transform_17(%arg0: i32) -> (i32, i32, i32) {
    %c0_i32 = arith.constant 0 : i32
    %c0_i32_0 = arith.constant 0 : i32
    %c0_i32_1 = arith.constant 0 : i32
    return %arg0, %c0_i32, %c0_i32_0 : i32, i32, i32
  }
}

</mosaic_0001>

<llo_original>
// kernel: tpu_custom_call.1
$region0: #{tpu_custom_call.1}
  #allocation0 [shape = 'u32[]', space=smem, size = 0x4, offset = 0x4, fixed_abs, tag = 'smem constant byte address 0x4 - core index']
  #allocation1 [shape = 'u32[72,128]{1,0:T(1,128)}', space=vmem, size = 0x9000, scoped, tag = 'internal scratch']
  %s0 = inlined_call_operand.vmem [shape: f32[2,8,32], index: 0, kind: input, shape index: {}]
  %s1 = inlined_call_operand.vmem [shape: bf16[32,32], index: 1, kind: input, shape index: {}]
  %s2 = inlined_call_operand.vmem [shape: bf16[32,32], index: 2, kind: input, shape index: {}]
  %s3 = inlined_call_operand.hbm [shape: bf16[32,32], index: 3, kind: input, shape index: {}]
  %s4 = inlined_call_operand.hbm [shape: bf16[32,32], index: 4, kind: input, shape index: {}]
  %s5 = inlined_call_operand.vmem [shape: f32[1,32], index: 5, kind: input, shape index: {}]
  %s6 = inlined_call_operand.vmem [shape: f32[1,32], index: 6, kind: input, shape index: {}]
  %s7 = inlined_call_operand.vmem [shape: f32[1,32], index: 7, kind: input, shape index: {}]
  %s8 = inlined_call_operand.vmem [shape: f32[1,32], index: 8, kind: input, shape index: {}]
  %s9 = inlined_call_operand.vmem [shape: f32[1,32], index: 9, kind: input, shape index: {}]
  %s10 = inlined_call_operand.vmem [shape: f32[1,32], index: 10, kind: input, shape index: {}]
  %s11 = inlined_call_operand.hbm [shape: bf16[32,64], index: 11, kind: input, shape index: {}]
  %s12 = inlined_call_operand.vmem [shape: f32[1,64], index: 12, kind: input, shape index: {}]
  %s13 = inlined_call_operand.vmem [shape: bf16[64,32], index: 13, kind: input, shape index: {}]
  %s14 = inlined_call_operand.vmem [shape: f32[1,32], index: 14, kind: input, shape index: {}]
  %s15 = inlined_call_operand.vmem [shape: f32[1,32], index: 15, kind: input, shape index: {}]
  %s16 = inlined_call_operand.vmem [shape: f32[1,32], index: 16, kind: input, shape index: {}]
  %s17 = inlined_call_operand.hbm [shape: f32[2,8,32], index: 17, kind: output, shape index: {}]
  %s18 = sld [smem:[#allocation0]]
  $region113: #{tpu_custom_call.1} parent=0
    _
  %s20 = ssub.s32 1, %s18
  %s21 = scalar_select 0, %s20, %s18
  $region1: #{tpu_custom_call.1} parent=0
    #allocation2 [shape = 'u8[8192]{0}', space=vmem, size = 0x2000, scoped, tag = 'input window, operand 3, single buffered']
    #allocation3 [shape = 's32[2]{0}', space=sflag, size = 0x8, scoped, tag = 'scoped memory for tpu_custom_call.1']
    #allocation4 [shape = 's32[2]{0}', space=sflag, size = 0x8, scoped, tag = 'scoped memory for tpu_custom_call.1']
    #allocation5 [shape = 'u8[8192]{0}', space=vmem, size = 0x2000, scoped, tag = 'input window, operand 4, single buffered']
    #allocation6 [shape = 's32[1]{0}', space=sflag, size = 0x4, scoped, tag = 'scoped memory for tpu_custom_call.1']
    #allocation7 [shape = 'u8[8192]{0}', space=vmem, size = 0x2000, scoped, tag = 'input window, operand 11, single buffered']
    #allocation8 [shape = 'u8[8192]{0}', space=vmem, size = 0x2000, scoped, tag = 'output window, operand 0']
    %22 = vsyncpa [#allocation3], 0
    %23 = vsyncpa [#allocation6], 0
    %24 = vsyncpa [#allocation4], 0
    %s25 = scalar_lea.sflag [#allocation4], 1
    %26 = vsyncpa %s25, 0
    loop: start=0, step=1, limit=4
    $region2: #{tpu_custom_call.1} parent=1 // loop_pre_header
      _
    $region3: #{tpu_custom_call.1} parent=1 // loop_header
      %s28 = sphi 0, %s32
      %p29 = scmp.ge.s32.totalorder %s28, 4
      %s38 = sphi 0, %s40
      %s41 = sphi 0, %s38
      %s42 = sphi 0, %s41
      %s58 = sphi 0, %s42
      %s62 = sphi 0, %s62
      %s64 = sphi 0, %s62
      %s65 = sphi 0, %s64
      %s79 = sphi 0, %s65
      %s83 = sphi 0, %s83
      %s85 = sphi 0, %s83
      %s86 = sphi 0, %s85
      %s100 = sphi 0, %s86
      %s104 = sphi 0, %s104
      %s106 = sphi 0, %s104
      %s107 = sphi 0, %s106
      %s121 = sphi 0, %s107
      %s125 = sphi 0, %s125
      %s127 = sphi 0, %s125
      %s128 = sphi 0, %s127
      %s142 = sphi 0, %s128
      %s146 = sphi 0, %s146
      %s148 = sphi 0, %s146
      %s149 = sphi 0, %s148
      %s163 = sphi 0, %s149
      %s167 = sphi 0, %s167
      %s169 = sphi 0, %s167
      %s170 = sphi 0, %s169
      %s184 = sphi 0, %s170
      %s188 = sphi 0, %s188
      %s190 = sphi 0, %s188
      %s191 = sphi 0, %s190
      %s205 = sphi 0, %s191
      %s209 = sphi 0, %s209
      %s211 = sphi 0, %s209
      %s212 = sphi 0, %s211
      %s226 = sphi 0, %s212
      %s230 = sphi 0, %s230
      %s232 = sphi 0, %s230
      %s233 = sphi 0, %s232
      %s247 = sphi 0, %s233
      %s251 = sphi 0, %s251
      %s253 = sphi 0, %s251
      %s254 = sphi 0, %s253
      %s268 = sphi 0, %s254
      %s272 = sphi 0, %s272
      %s274 = sphi 0, %s272
      %s275 = sphi 0, %s274
      %s289 = sphi 0, %s275
      %s293 = sphi 0, %s293
      %s295 = sphi 0, %s293
      %s296 = sphi 0, %s295
      %s310 = sphi 0, %s296
      %s314 = sphi 0, %s314
      %s316 = sphi 0, %s314
      %s317 = sphi 0, %s316
      %s331 = sphi 0, %s317
      %s335 = sphi 0, %s335
      %s337 = sphi 0, %s335
      %s338 = sphi 0, %s337
      %s352 = sphi 0, %s338
      %s356 = sphi 0, %s356
      %s358 = sphi 0, %s356
      %s359 = sphi 0, %s358
      %s373 = sphi 0, %s359
      %s377 = sphi 0, %s377
      %s379 = sphi 0, %s377
      %s380 = sphi 0, %s379
      %s394 = sphi 0, %s380
      %s400 = sphi 0, %s402
      %s403 = sphi 0, %s400
      %s404 = sphi 0, %s403
      %s420 = sphi 0, %s404
    $region4: #{tpu_custom_call.1} parent=1 // loop_header_branch
      %31 = sbr.rel (%p29) target = $region8
    $region5: #{tpu_custom_call.1} parent=1 // loop_body
      %s33 = ssub.s32 %s28, 1
      %s34 = ssub.s32 %s28, 2
      %s35 = sadd.s32 %s28, 1
      %s36 = ssub.s32 %s28, %s35
      %p37 = scmp.eq.s32.totalorder %s36, 0
      %s39 = sadd.s32 %s38, 1
      %s40 = scalar_select %p37, %s38, %s39
      %p43 = pneg %p37
      %p44 = scmp.eq.s32.totalorder %s28, 1
      %p45 = por %p43, %p44
      %p46 = scmp.ne.s32.totalorder %s38, %s41
      %p47 = scmp.eq.s32.totalorder %s28, 0
      %p48 = por %p46, %p47
      %p49 = scmp.ne.s32.totalorder %s38, %s41
      %p50 = scmp.eq.s32.totalorder %s33, 1
      %p51 = por %p49, %p50
      %p52 = scmp.ne.s32.totalorder %s41, %s42
      %p53 = scmp.eq.s32.totalorder %s33, 0
      %p54 = por %p52, %p53
      %p55 = scmp.ne.s32.totalorder %s41, %s42
      %p56 = scmp.eq.s32.totalorder %s34, 1
      %p57 = por %p55, %p56
      %p59 = scmp.ne.s32.totalorder %s42, %s58
      %p60 = scmp.eq.s32.totalorder %s34, 0
      %p61 = por %p59, %p60
      %s63 = sadd.s32 %s62, 1
      %p66 = scmp.eq.s32.totalorder %s28, 1
      %p67 = scmp.ne.s32.totalorder %s62, %s64
      %p68 = scmp.eq.s32.totalorder %s28, 0
      %p69 = por %p67, %p68
      %p70 = scmp.ne.s32.totalorder %s62, %s64
      %p71 = scmp.eq.s32.totalorder %s33, 1
      %p72 = por %p70, %p71
      %p73 = scmp.ne.s32.totalorder %s64, %s65
      %p74 = scmp.eq.s32.totalorder %s33, 0
      %p75 = por %p73, %p74
      %p76 = scmp.ne.s32.totalorder %s64, %s65
      %p77 = scmp.eq.s32.totalorder %s34, 1
      %p78 = por %p76, %p77
      %p80 = scmp.ne.s32.totalorder %s65, %s79
      %p81 = scmp.eq.s32.totalorder %s34, 0
      %p82 = por %p80, %p81
      %s84 = sadd.s32 %s83, 1
      %p87 = scmp.eq.s32.totalorder %s28, 1
      %p88 = scmp.ne.s32.totalorder %s83, %s85
      %p89 = scmp.eq.s32.totalorder %s28, 0
      %p90 = por %p88, %p89
      %p91 = scmp.ne.s32.totalorder %s83, %s85
      %p92 = scmp.eq.s32.totalorder %s33, 1
      %p93 = por %p91, %p92
      %p94 = scmp.ne.s32.totalorder %s85, %s86
      %p95 = scmp.eq.s32.totalorder %s33, 0
      %p96 = por %p94, %p95
      %p97 = scmp.ne.s32.totalorder %s85, %s86
      %p98 = scmp.eq.s32.totalorder %s34, 1
      %p99 = por %p97, %p98
      %p101 = scmp.ne.s32.totalorder %s86, %s100
      %p102 = scmp.eq.s32.totalorder %s34, 0
      %p103 = por %p101, %p102
      %s105 = sadd.s32 %s104, 1
      %p108 = scmp.eq.s32.totalorder %s28, 1
      %p109 = scmp.ne.s32.totalorder %s104, %s106
      %p110 = scmp.eq.s32.totalorder %s28, 0
      %p111 = por %p109, %p110
      %p112 = scmp.ne.s32.totalorder %s104, %s106
      %p113 = scmp.eq.s32.totalorder %s33, 1
      %p114 = por %p112, %p113
      %p115 = scmp.ne.s32.totalorder %s106, %s107
      %p116 = scmp.eq.s32.totalorder %s33, 0
      %p117 = por %p115, %p116
      %p118 = scmp.ne.s32.totalorder %s106, %s107
      %p119 = scmp.eq.s32.totalorder %s34, 1
      %p120 = por %p118, %p119
      %p122 = scmp.ne.s32.totalorder %s107, %s121
      %p123 = scmp.eq.s32.totalorder %s34, 0
      %p124 = por %p122, %p123
      %s126 = sadd.s32 %s125, 1
      %p129 = scmp.eq.s32.totalorder %s28, 1
      %p130 = scmp.ne.s32.totalorder %s125, %s127
      %p131 = scmp.eq.s32.totalorder %s28, 0
      %p132 = por %p130, %p131
      %p133 = scmp.ne.s32.totalorder %s125, %s127
      %p134 = scmp.eq.s32.totalorder %s33, 1
      %p135 = por %p133, %p134
      %p136 = scmp.ne.s32.totalorder %s127, %s128
      %p137 = scmp.eq.s32.totalorder %s33, 0
      %p138 = por %p136, %p137
      %p139 = scmp.ne.s32.totalorder %s127, %s128
      %p140 = scmp.eq.s32.totalorder %s34, 1
      %p141 = por %p139, %p140
      %p143 = scmp.ne.s32.totalorder %s128, %s142
      %p144 = scmp.eq.s32.totalorder %s34, 0
      %p145 = por %p143, %p144
      %s147 = sadd.s32 %s146, 1
      %p150 = scmp.eq.s32.totalorder %s28, 1
      %p151 = scmp.ne.s32.totalorder %s146, %s148
      %p152 = scmp.eq.s32.totalorder %s28, 0
      %p153 = por %p151, %p152
      %p154 = scmp.ne.s32.totalorder %s146, %s148
      %p155 = scmp.eq.s32.totalorder %s33, 1
      %p156 = por %p154, %p155
      %p157 = scmp.ne.s32.totalorder %s148, %s149
      %p158 = scmp.eq.s32.totalorder %s33, 0
      %p159 = por %p157, %p158
      %p160 = scmp.ne.s32.totalorder %s148, %s149
      %p161 = scmp.eq.s32.totalorder %s34, 1
      %p162 = por %p160, %p161
      %p164 = scmp.ne.s32.totalorder %s149, %s163
      %p165 = scmp.eq.s32.totalorder %s34, 0
      %p166 = por %p164, %p165
      %s168 = sadd.s32 %s167, 1
      %p171 = scmp.eq.s32.totalorder %s28, 1
      %p172 = scmp.ne.s32.totalorder %s167, %s169
      %p173 = scmp.eq.s32.totalorder %s28, 0
      %p174 = por %p172, %p173
      %p175 = scmp.ne.s32.totalorder %s167, %s169
      %p176 = scmp.eq.s32.totalorder %s33, 1
      %p177 = por %p175, %p176
      %p178 = scmp.ne.s32.totalorder %s169, %s170
      %p179 = scmp.eq.s32.totalorder %s33, 0
      %p180 = por %p178, %p179
      %p181 = scmp.ne.s32.totalorder %s169, %s170
      %p182 = scmp.eq.s32.totalorder %s34, 1
      %p183 = por %p181, %p182
      %p185 = scmp.ne.s32.totalorder %s170, %s184
      %p186 = scmp.eq.s32.totalorder %s34, 0
      %p187 = por %p185, %p186
      %s189 = sadd.s32 %s188, 1
      %p192 = scmp.eq.s32.totalorder %s28, 1
      %p193 = scmp.ne.s32.totalorder %s188, %s190
      %p194 = scmp.eq.s32.totalorder %s28, 0
      %p195 = por %p193, %p194
      %p196 = scmp.ne.s32.totalorder %s188, %s190
      %p197 = scmp.eq.s32.totalorder %s33, 1
      %p198 = por %p196, %p197
      %p199 = scmp.ne.s32.totalorder %s190, %s191
      %p200 = scmp.eq.s32.totalorder %s33, 0
      %p201 = por %p199, %p200
      %p202 = scmp.ne.s32.totalorder %s190, %s191
      %p203 = scmp.eq.s32.totalorder %s34, 1
      %p204 = por %p202, %p203
      %p206 = scmp.ne.s32.totalorder %s191, %s205
      %p207 = scmp.eq.s32.totalorder %s34, 0
      %p208 = por %p206, %p207
      %s210 = sadd.s32 %s209, 1
      %p213 = scmp.eq.s32.totalorder %s28, 1
      %p214 = scmp.ne.s32.totalorder %s209, %s211
      %p215 = scmp.eq.s32.totalorder %s28, 0
      %p216 = por %p214, %p215
      %p217 = scmp.ne.s32.totalorder %s209, %s211
      %p218 = scmp.eq.s32.totalorder %s33, 1
      %p219 = por %p217, %p218
      %p220 = scmp.ne.s32.totalorder %s211, %s212
      %p221 = scmp.eq.s32.totalorder %s33, 0
      %p222 = por %p220, %p221
      %p223 = scmp.ne.s32.totalorder %s211, %s212
      %p224 = scmp.eq.s32.totalorder %s34, 1
      %p225 = por %p223, %p224
      %p227 = scmp.ne.s32.totalorder %s212, %s226
      %p228 = scmp.eq.s32.totalorder %s34, 0
      %p229 = por %p227, %p228
      %s231 = sadd.s32 %s230, 1
      %p234 = scmp.eq.s32.totalorder %s28, 1
      %p235 = scmp.ne.s32.totalorder %s230, %s232
      %p236 = scmp.eq.s32.totalorder %s28, 0
      %p237 = por %p235, %p236
      %p238 = scmp.ne.s32.totalorder %s230, %s232
      %p239 = scmp.eq.s32.totalorder %s33, 1
      %p240 = por %p238, %p239
      %p241 = scmp.ne.s32.totalorder %s232, %s233
      %p242 = scmp.eq.s32.totalorder %s33, 0
      %p243 = por %p241, %p242
      %p244 = scmp.ne.s32.totalorder %s232, %s233
      %p245 = scmp.eq.s32.totalorder %s34, 1
      %p246 = por %p244, %p245
      %p248 = scmp.ne.s32.totalorder %s233, %s247
      %p249 = scmp.eq.s32.totalorder %s34, 0
      %p250 = por %p248, %p249
      %s252 = sadd.s32 %s251, 1
      %p255 = scmp.eq.s32.totalorder %s28, 1
      %p256 = scmp.ne.s32.totalorder %s251, %s253
      %p257 = scmp.eq.s32.totalorder %s28, 0
      %p258 = por %p256, %p257
      %p259 = scmp.ne.s32.totalorder %s251, %s253
      %p260 = scmp.eq.s32.totalorder %s33, 1
      %p261 = por %p259, %p260
      %p262 = scmp.ne.s32.totalorder %s253, %s254
      %p263 = scmp.eq.s32.totalorder %s33, 0
      %p264 = por %p262, %p263
      %p265 = scmp.ne.s32.totalorder %s253, %s254
      %p266 = scmp.eq.s32.totalorder %s34, 1
      %p267 = por %p265, %p266
      %p269 = scmp.ne.s32.totalorder %s254, %s268
      %p270 = scmp.eq.s32.totalorder %s34, 0
      %p271 = por %p269, %p270
      %s273 = sadd.s32 %s272, 1
      %p276 = scmp.eq.s32.totalorder %s28, 1
      %p277 = scmp.ne.s32.totalorder %s272, %s274
      %p278 = scmp.eq.s32.totalorder %s28, 0
      %p279 = por %p277, %p278
      %p280 = scmp.ne.s32.totalorder %s272, %s274
      %p281 = scmp.eq.s32.totalorder %s33, 1
      %p282 = por %p280, %p281
      %p283 = scmp.ne.s32.totalorder %s274, %s275
      %p284 = scmp.eq.s32.totalorder %s33, 0
      %p285 = por %p283, %p284
      %p286 = scmp.ne.s32.totalorder %s274, %s275
      %p287 = scmp.eq.s32.totalorder %s34, 1
      %p288 = por %p286, %p287
      %p290 = scmp.ne.s32.totalorder %s275, %s289
      %p291 = scmp.eq.s32.totalorder %s34, 0
      %p292 = por %p290, %p291
      %s294 = sadd.s32 %s293, 1
      %p297 = scmp.eq.s32.totalorder %s28, 1
      %p298 = scmp.ne.s32.totalorder %s293, %s295
      %p299 = scmp.eq.s32.totalorder %s28, 0
      %p300 = por %p298, %p299
      %p301 = scmp.ne.s32.totalorder %s293, %s295
      %p302 = scmp.eq.s32.totalorder %s33, 1
      %p303 = por %p301, %p302
      %p304 = scmp.ne.s32.totalorder %s295, %s296
      %p305 = scmp.eq.s32.totalorder %s33, 0
      %p306 = por %p304, %p305
      %p307 = scmp.ne.s32.totalorder %s295, %s296
      %p308 = scmp.eq.s32.totalorder %s34, 1
      %p309 = por %p307, %p308
      %p311 = scmp.ne.s32.totalorder %s296, %s310
      %p312 = scmp.eq.s32.totalorder %s34, 0
      %p313 = por %p311, %p312
      %s315 = sadd.s32 %s314, 1
      %p318 = scmp.eq.s32.totalorder %s28, 1
      %p319 = scmp.ne.s32.totalorder %s314, %s316
      %p320 = scmp.eq.s32.totalorder %s28, 0
      %p321 = por %p319, %p320
      %p322 = scmp.ne.s32.totalorder %s314, %s316
      %p323 = scmp.eq.s32.totalorder %s33, 1
      %p324 = por %p322, %p323
      %p325 = scmp.ne.s32.totalorder %s316, %s317
      %p326 = scmp.eq.s32.totalorder %s33, 0
      %p327 = por %p325, %p326
      %p328 = scmp.ne.s32.totalorder %s316, %s317
      %p329 = scmp.eq.s32.totalorder %s34, 1
      %p330 = por %p328, %p329
      %p332 = scmp.ne.s32.totalorder %s317, %s331
      %p333 = scmp.eq.s32.totalorder %s34, 0
      %p334 = por %p332, %p333
      %s336 = sadd.s32 %s335, 1
      %p339 = scmp.eq.s32.totalorder %s28, 1
      %p340 = scmp.ne.s32.totalorder %s335, %s337
      %p341 = scmp.eq.s32.totalorder %s28, 0
      %p342 = por %p340, %p341
      %p343 = scmp.ne.s32.totalorder %s335, %s337
      %p344 = scmp.eq.s32.totalorder %s33, 1
      %p345 = por %p343, %p344
      %p346 = scmp.ne.s32.totalorder %s337, %s338
      %p347 = scmp.eq.s32.totalorder %s33, 0
      %p348 = por %p346, %p347
      %p349 = scmp.ne.s32.totalorder %s337, %s338
      %p350 = scmp.eq.s32.totalorder %s34, 1
      %p351 = por %p349, %p350
      %p353 = scmp.ne.s32.totalorder %s338, %s352
      %p354 = scmp.eq.s32.totalorder %s34, 0
      %p355 = por %p353, %p354
      %s357 = sadd.s32 %s356, 1
      %p360 = scmp.eq.s32.totalorder %s28, 1
      %p361 = scmp.ne.s32.totalorder %s356, %s358
      %p362 = scmp.eq.s32.totalorder %s28, 0
      %p363 = por %p361, %p362
      %p364 = scmp.ne.s32.totalorder %s356, %s358
      %p365 = scmp.eq.s32.totalorder %s33, 1
      %p366 = por %p364, %p365
      %p367 = scmp.ne.s32.totalorder %s358, %s359
      %p368 = scmp.eq.s32.totalorder %s33, 0
      %p369 = por %p367, %p368
      %p370 = scmp.ne.s32.totalorder %s358, %s359
      %p371 = scmp.eq.s32.totalorder %s34, 1
      %p372 = por %p370, %p371
      %p374 = scmp.ne.s32.totalorder %s359, %s373
      %p375 = scmp.eq.s32.totalorder %s34, 0
      %p376 = por %p374, %p375
      %s378 = sadd.s32 %s377, 1
      %p381 = scmp.eq.s32.totalorder %s28, 1
      %p382 = scmp.ne.s32.totalorder %s377, %s379
      %p383 = scmp.eq.s32.totalorder %s28, 0
      %p384 = por %p382, %p383
      %p385 = scmp.ne.s32.totalorder %s377, %s379
      %p386 = scmp.eq.s32.totalorder %s33, 1
      %p387 = por %p385, %p386
      %p388 = scmp.ne.s32.totalorder %s379, %s380
      %p389 = scmp.eq.s32.totalorder %s33, 0
      %p390 = por %p388, %p389
      %p391 = scmp.ne.s32.totalorder %s379, %s380
      %p392 = scmp.eq.s32.totalorder %s34, 1
      %p393 = por %p391, %p392
      %p395 = scmp.ne.s32.totalorder %s380, %s394
      %p396 = scmp.eq.s32.totalorder %s34, 0
      %p397 = por %p395, %p396
      %s398 = ssub.s32 %s28, %s35
      %p399 = scmp.eq.s32.totalorder %s398, 0
      %s401 = sadd.s32 %s400, 1
      %s402 = scalar_select %p399, %s400, %s401
      %p405 = pneg %p399
      %p406 = scmp.eq.s32.totalorder %s28, 1
      %p407 = por %p405, %p406
      %p408 = scmp.ne.s32.totalorder %s400, %s403
      %p409 = scmp.eq.s32.totalorder %s28, 0
      %p410 = por %p408, %p409
      %p411 = scmp.ne.s32.totalorder %s400, %s403
      %p412 = scmp.eq.s32.totalorder %s33, 1
      %p413 = por %p411, %p412
      %p414 = scmp.ne.s32.totalorder %s403, %s404
      %p415 = scmp.eq.s32.totalorder %s33, 0
      %p416 = por %p414, %p415
      %p417 = scmp.ne.s32.totalorder %s403, %s404
      %p418 = scmp.eq.s32.totalorder %s34, 1
      %p419 = por %p417, %p418
      %p421 = scmp.ne.s32.totalorder %s404, %s420
      %p422 = scmp.eq.s32.totalorder %s34, 0
      %p423 = por %p421, %p422
      %p424 = scmp.le.s32.totalorder 1, %s28
      %p425 = scmp.lt.s32.totalorder %s28, 3
      %p426 = pnand %p424, %p425
      %p427 = pneg %p426
      // Predicated region
      $region9: #{tpu_custom_call.1} parent=5 // pred_check
        _
      $region10: #{tpu_custom_call.1} parent=5 // pred_check_branch
        %429 = sbr.rel (%p426) target = $region12
      $region11: #{tpu_custom_call.1} parent=5 // pred_region
        %s430 = ssub.s32 %s28, 1
        // Predicated region
        $region13: #{tpu_custom_call.1} parent=11 // pred_check
          %p431 = pneg %p75
        $region14: #{tpu_custom_call.1} parent=11 // pred_check_branch
          %433 = sbr.rel (%p431) target = $region16
        $region15: #{tpu_custom_call.1} parent=11 // pred_region
          _
        $region16: #{tpu_custom_call.1} parent=11 // pred_fallthru
          _
        // Predicated region
        $region17: #{tpu_custom_call.1} parent=11 // pred_check
          %p434 = pneg %p96
        $region18: #{tpu_custom_call.1} parent=11 // pred_check_branch
          %436 = sbr.rel (%p434) target = $region20
        $region19: #{tpu_custom_call.1} parent=11 // pred_region
          _
        $region20: #{tpu_custom_call.1} parent=11 // pred_fallthru
          _
        // Predicated region
        $region21: #{tpu_custom_call.1} parent=11 // pred_check
          %p437 = pneg %p117
        $region22: #{tpu_custom_call.1} parent=11 // pred_check_branch
          %439 = sbr.rel (%p437) target = $region24
        $region23: #{tpu_custom_call.1} parent=11 // pred_region
          %441 = vsyncadd [#allocation3], 0
          %s442 = sshll.u32 %s3, 4
          %s443 = int_to_ptr.hbm [resolvable:$true] %s442
          %s444 = sshll.u32 [#allocation2], 4
          %s445 = int_to_ptr.vmem [resolvable:$true] %s444
          %450 = dma.hbm_to_vmem [thread:$0]  %s443, 256, %s445, [#allocation3], 64, 64, 4
        $region24: #{tpu_custom_call.1} parent=11 // pred_fallthru
          _
        // Predicated region
        $region25: #{tpu_custom_call.1} parent=11 // pred_check
          %p451 = pneg %p138
        $region26: #{tpu_custom_call.1} parent=11 // pred_check_branch
          %453 = sbr.rel (%p451) target = $region28
        $region27: #{tpu_custom_call.1} parent=11 // pred_region
          %455 = vsyncadd [#allocation6], 0
          %s456 = sshll.u32 %s4, 4
          %s457 = int_to_ptr.hbm [resolvable:$true] %s456
          %s458 = sshll.u32 [#allocation5], 4
          %s459 = int_to_ptr.vmem [resolvable:$true] %s458
          %464 = dma.hbm_to_vmem [thread:$0]  %s457, 256, %s459, [#allocation6], 64, 64, 4
        $region28: #{tpu_custom_call.1} parent=11 // pred_fallthru
          _
        // Predicated region
        $region29: #{tpu_custom_call.1} parent=11 // pred_check
          %p465 = pneg %p159
        $region30: #{tpu_custom_call.1} parent=11 // pred_check_branch
          %467 = sbr.rel (%p465) target = $region32
        $region31: #{tpu_custom_call.1} parent=11 // pred_region
          _
        $region32: #{tpu_custom_call.1} parent=11 // pred_fallthru
          _
        // Predicated region
        $region33: #{tpu_custom_call.1} parent=11 // pred_check
          %p468 = pneg %p180
        $region34: #{tpu_custom_call.1} parent=11 // pred_check_branch
          %470 = sbr.rel (%p468) target = $region36
        $region35: #{tpu_custom_call.1} parent=11 // pred_region
          _
        $region36: #{tpu_custom_call.1} parent=11 // pred_fallthru
          _
        // Predicated region
        $region37: #{tpu_custom_call.1} parent=11 // pred_check
          %p471 = pneg %p201
        $region38: #{tpu_custom_call.1} parent=11 // pred_check_branch
          %473 = sbr.rel (%p471) target = $region40
        $region39: #{tpu_custom_call.1} parent=11 // pred_region
          _
        $region40: #{tpu_custom_call.1} parent=11 // pred_fallthru
          _
        // Predicated region
        $region41: #{tpu_custom_call.1} parent=11 // pred_check
          %p474 = pneg %p222
        $region42: #{tpu_custom_call.1} parent=11 // pred_check_branch
          %476 = sbr.rel (%p474) target = $region44
        $region43: #{tpu_custom_call.1} parent=11 // pred_region
          _
        $region44: #{tpu_custom_call.1} parent=11 // pred_fallthru
          _
        // Predicated region
        $region45: #{tpu_custom_call.1} parent=11 // pred_check
          %p477 = pneg %p243
        $region46: #{tpu_custom_call.1} parent=11 // pred_check_branch
          %479 = sbr.rel (%p477) target = $region48
        $region47: #{tpu_custom_call.1} parent=11 // pred_region
          _
        $region48: #{tpu_custom_call.1} parent=11 // pred_fallthru
          _
        // Predicated region
        $region49: #{tpu_custom_call.1} parent=11 // pred_check
          %p480 = pneg %p264
        $region50: #{tpu_custom_call.1} parent=11 // pred_check_branch
          %482 = sbr.rel (%p480) target = $region52
        $region51: #{tpu_custom_call.1} parent=11 // pred_region
          _
        $region52: #{tpu_custom_call.1} parent=11 // pred_fallthru
          _
        // Predicated region
        $region53: #{tpu_custom_call.1} parent=11 // pred_check
          %p483 = pneg %p285
        $region54: #{tpu_custom_call.1} parent=11 // pred_check_branch
          %485 = sbr.rel (%p483) target = $region56
        $region55: #{tpu_custom_call.1} parent=11 // pred_region
          %487 = vsyncadd [#allocation6], 0
          %s488 = sshll.u32 %s11, 4
          %s489 = int_to_ptr.hbm [resolvable:$true] %s488
          %s490 = sshll.u32 [#allocation7], 4
          %s491 = int_to_ptr.vmem [resolvable:$true] %s490
          %496 = dma.hbm_to_vmem [thread:$0]  %s489, 256, %s491, [#allocation6], 64, 64, 4
        $region56: #{tpu_custom_call.1} parent=11 // pred_fallthru
          _
        // Predicated region
        $region57: #{tpu_custom_call.1} parent=11 // pred_check
          %p497 = pneg %p306
        $region58: #{tpu_custom_call.1} parent=11 // pred_check_branch
          %499 = sbr.rel (%p497) target = $region60
        $region59: #{tpu_custom_call.1} parent=11 // pred_region
          _
        $region60: #{tpu_custom_call.1} parent=11 // pred_fallthru
          _
        // Predicated region
        $region61: #{tpu_custom_call.1} parent=11 // pred_check
          %p500 = pneg %p327
        $region62: #{tpu_custom_call.1} parent=11 // pred_check_branch
          %502 = sbr.rel (%p500) target = $region64
        $region63: #{tpu_custom_call.1} parent=11 // pred_region
          _
        $region64: #{tpu_custom_call.1} parent=11 // pred_fallthru
          _
        // Predicated region
        $region65: #{tpu_custom_call.1} parent=11 // pred_check
          %p503 = pneg %p348
        $region66: #{tpu_custom_call.1} parent=11 // pred_check_branch
          %505 = sbr.rel (%p503) target = $region68
        $region67: #{tpu_custom_call.1} parent=11 // pred_region
          _
        $region68: #{tpu_custom_call.1} parent=11 // pred_fallthru
          _
        // Predicated region
        $region69: #{tpu_custom_call.1} parent=11 // pred_check
          %p506 = pneg %p369
        $region70: #{tpu_custom_call.1} parent=11 // pred_check_branch
          %508 = sbr.rel (%p506) target = $region72
        $region71: #{tpu_custom_call.1} parent=11 // pred_region
          _
        $region72: #{tpu_custom_call.1} parent=11 // pred_fallthru
          _
        // Predicated region
        $region73: #{tpu_custom_call.1} parent=11 // pred_check
          %p509 = pneg %p390
        $region74: #{tpu_custom_call.1} parent=11 // pred_check_branch
          %511 = sbr.rel (%p509) target = $region76
        $region75: #{tpu_custom_call.1} parent=11 // pred_region
          _
        $region76: #{tpu_custom_call.1} parent=11 // pred_fallthru
          _
      $region12: #{tpu_custom_call.1} parent=5 // pred_fallthru
        _
      %p512 = scmp.lt.s32.totalorder %s28, 2
      // Predicated region
      $region77: #{tpu_custom_call.1} parent=5 // pred_check
        %p513 = pneg %p512
      $region78: #{tpu_custom_call.1} parent=5 // pred_check_branch
        %515 = sbr.rel (%p513) target = $region80
      $region79: #{tpu_custom_call.1} parent=5 // pred_region
        // Predicated region
        $region81: #{tpu_custom_call.1} parent=79 // pred_check
          %p516 = pneg %p48
        $region82: #{tpu_custom_call.1} parent=79 // pred_check_branch
          %518 = sbr.rel (%p516) target = $region84
        $region83: #{tpu_custom_call.1} parent=79 // pred_region
          %p519 = scmp.lt.s32.totalorder %s28, 1
          %s520 = scalar_select %p519, %s28, 1
          %s521 = smul.addr %s520, 8
          %s522 = scalar_lea.vmem %s0, %s521
        $region84: #{tpu_custom_call.1} parent=79 // pred_fallthru
          _
      $region80: #{tpu_custom_call.1} parent=5 // pred_fallthru
        _
      %p523 = scmp.le.s32.totalorder 1, %s28
      %p524 = scmp.lt.s32.totalorder %s28, 3
      %p525 = pnand %p523, %p524
      %p526 = pneg %p525
      // Predicated region
      $region85: #{tpu_custom_call.1} parent=5 // pred_check
        _
      $region86: #{tpu_custom_call.1} parent=5 // pred_check_branch
        %528 = sbr.rel (%p525) target = $region88
      $region87: #{tpu_custom_call.1} parent=5 // pred_region
        %s529 = ssub.s32 %s28, 1
        // Predicated region
        $region89: #{tpu_custom_call.1} parent=87 // pred_check
          %p530 = pneg %p117
        $region90: #{tpu_custom_call.1} parent=87 // pred_check_branch
          %532 = sbr.rel (%p530) target = $region92
        $region91: #{tpu_custom_call.1} parent=87 // pred_region
          %534 = dma.done [#allocation3], 256
        $region92: #{tpu_custom_call.1} parent=87 // pred_fallthru
          _
        // Predicated region
        $region93: #{tpu_custom_call.1} parent=87 // pred_check
          %p535 = pneg %p138
        $region94: #{tpu_custom_call.1} parent=87 // pred_check_branch
          %537 = sbr.rel (%p535) target = $region96
        $region95: #{tpu_custom_call.1} parent=87 // pred_region
          %539 = dma.done [#allocation6], 256
        $region96: #{tpu_custom_call.1} parent=87 // pred_fallthru
          _
        // Predicated region
        $region97: #{tpu_custom_call.1} parent=87 // pred_check
          %p540 = pneg %p285
        $region98: #{tpu_custom_call.1} parent=87 // pred_check_branch
          %542 = sbr.rel (%p540) target = $region100
        $region99: #{tpu_custom_call.1} parent=87 // pred_region
          %544 = dma.done [#allocation6], 256
        $region100: #{tpu_custom_call.1} parent=87 // pred_fallthru
          _
        %p545 = scmp.lt.s32.totalorder %s33, 1
        %s546 = scalar_select %p545, %s33, 1
        %s547 = smul.addr %s546, 8
        %s548 = scalar_lea.vmem %s0, %s547
        %p549 = pneg %p54
        %p550 = pneg %p51
        %p551 = pneg %p75
        %p552 = pneg %p72
        %p553 = pneg %p96
        %p554 = pneg %p93
        %p555 = pneg %p117
        %p556 = pneg %p114
        %p557 = pneg %p138
        %p558 = pneg %p135
        %p559 = pneg %p159
        %p560 = pneg %p156
        %p561 = pneg %p180
        %p562 = pneg %p177
        %p563 = pneg %p201
        %p564 = pneg %p198
        %p565 = pneg %p222
        %p566 = pneg %p219
        %p567 = pneg %p243
        %p568 = pneg %p240
        %p569 = pneg %p264
        %p570 = pneg %p261
        %p571 = pneg %p285
        %p572 = pneg %p282
        %p573 = pneg %p306
        %p574 = pneg %p303
        %p575 = pneg %p327
        %p576 = pneg %p324
        %p577 = pneg %p348
        %p578 = pneg %p345
        %p579 = pneg %p369
        %p580 = pneg %p366
        %p581 = pneg %p390
        %p582 = pneg %p387
        %p583 = pneg %p416
        %p584 = pneg %p413
        %s585 = sand.u32 %s403, 1
        %s586 = scalar_lea.sflag [#allocation4], %s585
        %s587 = sand.u32 %s403, 1
        %s588 = smul.addr %s587, 8
        %s589 = scalar_lea.vmem [#allocation8], %s588
        %p590 = scmp.lt.s32.totalorder %s33, 1
        %s591 = scalar_select %p590, %s33, 1
        %s592 = smul.addr %s591, 8
        %s593 = scalar_lea.vmem %s0, %s592
        %v595 = vld [vmem:[%s593] sm:$0xff]
        %v596 = vpack.c.bf16 %v595, %v595
        %v597 = vld [vmem:[%s1] sm:$0xf]
        %v598 = vld [vmem:[%s1 + $0x4] sm:$0xf]
        %v599 = vld [vmem:[%s1 + $0x8] sm:$0xf]
        %v600 = vld [vmem:[%s1 + $0xc] sm:$0xf]
        %v601 = vld [vmem:[%s5] sm:$0x1]
        %v603 = vperm.slane %v601, 0
        %v609 = vunpack.c.l.b16 %v597
        %v610 = vunpack.c.l.b16 %v598
        %v611 = vunpack.c.l.b16 %v599
        %v612 = vunpack.c.l.b16 %v600
        %v613 = vpack.c.b16 %v610, %v609
        %v614 = vpack.c.b16 %v612, %v611
        %vm617 = vcmask 261120
        %v619 = vsel %vm617, %v596, 0
        %621 = vmatpush.bf16.msra.mxu0 0
        %622 = vmatpush.bf16.msra.mxu0 0
        %623 = vmatpush.bf16.msra.mxu0 0
        %624 = vmatpush.bf16.msra.mxu0 0
        %625 = vmatpush.bf16.msra.mxu0 0
        %626 = vmatpush.bf16.msra.mxu0 0
        %627 = vmatpush.bf16.msra.mxu0 %v614
        %628 = vmatpush.bf16.msra.mxu0 %v613
        %629 = vmatmul.bf16.gmra.mxu0 %v619
        %v630 = vpop.f32.mrf.mxu0
        %v631 = vadd.f32 %v603, %v630
        %v632 = vpop.f32.mrf.mxu0
        %633 = vdwg.mxu0
        %v634 = vld [vmem:[%s2] sm:$0xf]
        %v635 = vld [vmem:[%s2 + $0x4] sm:$0xf]
        %v636 = vld [vmem:[%s2 + $0x8] sm:$0xf]
        %v637 = vld [vmem:[%s2 + $0xc] sm:$0xf]
        %v638 = vld [vmem:[%s6] sm:$0x1]
        %v640 = vperm.slane %v638, 0
        %v646 = vunpack.c.l.b16 %v634
        %v647 = vunpack.c.l.b16 %v635
        %v648 = vunpack.c.l.b16 %v636
        %v649 = vunpack.c.l.b16 %v637
        %v650 = vpack.c.b16 %v647, %v646
        %v651 = vpack.c.b16 %v649, %v648
        %654 = vmatpush.bf16.msra.mxu0 0
        %655 = vmatpush.bf16.msra.mxu0 0
        %656 = vmatpush.bf16.msra.mxu0 0
        %657 = vmatpush.bf16.msra.mxu0 0
        %658 = vmatpush.bf16.msra.mxu0 0
        %659 = vmatpush.bf16.msra.mxu0 0
        %660 = vmatpush.bf16.msra.mxu0 %v651
        %661 = vmatpush.bf16.msra.mxu0 %v650
        %662 = vmatmul.bf16.gmra.mxu0 %v619
        %v663 = vpop.f32.mrf.mxu0
        %v664 = vadd.f32 %v640, %v663
        %v665 = vpop.f32.mrf.mxu0
        %666 = vdwg.mxu0
        %v667 = vld [vmem:[#allocation2] sm:$0xf]
        %v668 = vld [vmem:[#allocation2 + $0x4] sm:$0xf]
        %v669 = vld [vmem:[#allocation2 + $0x8] sm:$0xf]
        %v670 = vld [vmem:[#allocation2 + $0xc] sm:$0xf]
        %v671 = vld [vmem:[%s7] sm:$0x1]
        %v673 = vperm.slane %v671, 0
        %v679 = vunpack.c.l.b16 %v667
        %v680 = vunpack.c.l.b16 %v668
        %v681 = vunpack.c.l.b16 %v669
        %v682 = vunpack.c.l.b16 %v670
        %v683 = vpack.c.b16 %v680, %v679
        %v684 = vpack.c.b16 %v682, %v681
        %687 = vmatpush.bf16.msra.mxu0 0
        %688 = vmatpush.bf16.msra.mxu0 0
        %689 = vmatpush.bf16.msra.mxu0 0
        %690 = vmatpush.bf16.msra.mxu0 0
        %691 = vmatpush.bf16.msra.mxu0 0
        %692 = vmatpush.bf16.msra.mxu0 0
        %693 = vmatpush.bf16.msra.mxu0 %v684
        %694 = vmatpush.bf16.msra.mxu0 %v683
        %695 = vmatmul.bf16.gmra.mxu0 %v619
        %v696 = vpop.f32.mrf.mxu0
        %v697 = vadd.f32 %v673, %v696
        %v698 = vpop.f32.mrf.mxu0
        %699 = vdwg.mxu0
        %v700 = vpack.c.bf16 %v631, %v631
        %v701 = vpack.c.bf16 %v664, %v664
        %v702 = vpack.c.bf16 %v697, %v697
        %vm703 = vcmask 64512
        %v705 = vsel %vm703, %v700, 0
        %v708 = vsel %vm703, %v701, 0
        %710 = vmatpush.bf16.xpose.msra.mxu0 0
        %711 = vmatpush.bf16.xpose.msra.mxu0 0
        %712 = vmatpush.bf16.xpose.msra.mxu0 0
        %713 = vmatpush.bf16.xpose.msra.mxu0 0
        %714 = vmatpush.bf16.xpose.msra.mxu0 0
        %715 = vmatpush.bf16.xpose.msra.mxu0 0
        %716 = vmatpush.bf16.xpose.msra.mxu0 0
        %717 = vmatpush.bf16.xpose.msra.mxu0 %v708
        %718 = vmatmul.bf16.gmra.mxu0 %v705
        %v719 = vpop.f32.mrf.mxu0
        %v720 = vadd.f32 0.0, %v719
        %v721 = vpop.f32.mrf.mxu0
        %722 = vdwg.mxu0
        %v723 = vmul.f32 %v720, 0.35355338
        %v724 = vsel %vm703, %v723, -inf
        %725 = vmax.xlane.f32.xlu0 %v724
        %v726 = vpop.xlane.xlu0 %725
        %v727 = vsub.f32 %v723, %v726
        %v728 = vmul.f32 %v727, 1.442695
        %v729 = vpow.pop %v728
        %v730 = vsel %vm703, %v729, 0.0
        %731 = vadd.xlane.f32.xlu0 %v730
        %v732 = vpop.xlane.xlu0 %731
        %v733 = vrcp.pop %v732
        %v734 = vmul.f32 %v729, %v733
        %v735 = vpack.c.bf16 %v734, %v734
        %v737 = vsel %vm703, %v735, 0
        %vm739 = vcmask 1043456
        %v741 = vsel %vm739, %v702, 0
        %743 = vmatpush.bf16.msra.mxu0 0
        %744 = vmatpush.bf16.msra.mxu0 0
        %745 = vmatpush.bf16.msra.mxu0 0
        %746 = vmatpush.bf16.msra.mxu0 0
        %747 = vmatpush.bf16.msra.mxu0 0
        %748 = vmatpush.bf16.msra.mxu0 0
        %749 = vmatpush.bf16.msra.mxu0 0
        %750 = vmatpush.bf16.msra.mxu0 %v741
        %751 = vmatmul.bf16.gmra.mxu0 %v737
        %v752 = vpop.f32.mrf.mxu0
        %v753 = vadd.f32 0.0, %v752
        %v754 = vpop.f32.mrf.mxu0
        %755 = vdwg.mxu0
        %v756 = vpack.c.bf16 %v753, %v753
        %v757 = vld [vmem:[#allocation5] sm:$0xf]
        %v759 = vunpack.c.l.b16 %v700
        %v760 = vpack.c.b16 %v759, %v759
        %761 = vrot.lane.b32.xlu0 %v760, 120
        %v762 = vpop.permute.xlu0 %761
        %v764 = vunpack.c.l.b16 %v701
        %v765 = vpack.c.b16 %v764, %v764
        %766 = vrot.lane.b32.xlu0 %v765, 120
        %v767 = vpop.permute.xlu0 %766
        %v769 = vsel %vm703, %v762, 0
        %v772 = vsel %vm703, %v767, 0
        %774 = vmatpush.bf16.xpose.msra.mxu0 0
        %775 = vmatpush.bf16.xpose.msra.mxu0 0
        %776 = vmatpush.bf16.xpose.msra.mxu0 0
        %777 = vmatpush.bf16.xpose.msra.mxu0 0
        %778 = vmatpush.bf16.xpose.msra.mxu0 0
        %779 = vmatpush.bf16.xpose.msra.mxu0 0
        %780 = vmatpush.bf16.xpose.msra.mxu0 0
        %781 = vmatpush.bf16.xpose.msra.mxu0 %v772
        %782 = vmatmul.bf16.gmra.mxu0 %v769
        %v783 = vpop.f32.mrf.mxu0
        %v784 = vadd.f32 0.0, %v783
        %v785 = vpop.f32.mrf.mxu0
        %786 = vdwg.mxu0
        %v787 = vmul.f32 %v784, 0.35355338
        %v788 = vsel %vm703, %v787, -inf
        %789 = vmax.xlane.f32.xlu0 %v788
        %v790 = vpop.xlane.xlu0 %789
        %v791 = vsub.f32 %v787, %v790
        %v792 = vmul.f32 %v791, 1.442695
        %v793 = vpow.pop %v792
        %v794 = vsel %vm703, %v793, 0.0
        %795 = vadd.xlane.f32.xlu0 %v794
        %v796 = vpop.xlane.xlu0 %795
        %v797 = vrcp.pop %v796
        %v798 = vmul.f32 %v793, %v797
        %v799 = vpack.c.bf16 %v798, %v798
        %v801 = vunpack.c.l.b16 %v702
        %v802 = vpack.c.b16 %v801, %v801
        %803 = vrot.lane.b32.xlu0 %v802, 120
        %v804 = vpop.permute.xlu0 %803
        %v806 = vsel %vm703, %v799, 0
        %v809 = vsel %vm739, %v804, 0
        %811 = vmatpush.bf16.msra.mxu0 0
        %812 = vmatpush.bf16.msra.mxu0 0
        %813 = vmatpush.bf16.msra.mxu0 0
        %814 = vmatpush.bf16.msra.mxu0 0
        %815 = vmatpush.bf16.msra.mxu0 0
        %816 = vmatpush.bf16.msra.mxu0 0
        %817 = vmatpush.bf16.msra.mxu0 0
        %818 = vmatpush.bf16.msra.mxu0 %v809
        %819 = vmatmul.bf16.gmra.mxu0 %v806
        %v820 = vpop.f32.mrf.mxu0
        %v821 = vadd.f32 0.0, %v820
        %v822 = vpop.f32.mrf.mxu0
        %823 = vdwg.mxu0
        %v824 = vpack.c.bf16 %v821, %v821
        %v825 = vld [vmem:[#allocation5 + $0x4] sm:$0xf]
        %v827 = vsel %vm703, %v824, 0
        %v830 = vsel %vm739, %v825, 0
        %832 = vmatpush.bf16.msra.mxu0 0
        %833 = vmatpush.bf16.msra.mxu0 0
        %834 = vmatpush.bf16.msra.mxu0 0
        %835 = vmatpush.bf16.msra.mxu0 0
        %836 = vmatpush.bf16.msra.mxu0 0
        %837 = vmatpush.bf16.msra.mxu0 0
        %838 = vmatpush.bf16.msra.mxu0 0
        %839 = vmatpush.bf16.msra.mxu0 %v830
        %840 = vmatmul.bf16.gmra.mxu0 %v827
        %v841 = vpop.f32.mrf.mxu0
        %v842 = vadd.f32 0.0, %v841
        %v843 = vpop.f32.mrf.mxu0
        %844 = vdwg.mxu0
        %v846 = vsel %vm703, %v756, 0
        %v849 = vsel %vm739, %v757, 0
        %851 = vmatpush.bf16.msra.mxu0 0
        %852 = vmatpush.bf16.msra.mxu0 0
        %853 = vmatpush.bf16.msra.mxu0 0
        %854 = vmatpush.bf16.msra.mxu0 0
        %855 = vmatpush.bf16.msra.mxu0 0
        %856 = vmatpush.bf16.msra.mxu0 0
        %857 = vmatpush.bf16.msra.mxu0 0
        %858 = vmatpush.bf16.msra.mxu0 %v849
        %859 = vmatmul.bf16.gmra.mxu0 %v846
        %v860 = vpop.f32.mrf.mxu0
        %v861 = vadd.f32 %v842, %v860
        %v862 = vpop.f32.mrf.mxu0
        %863 = vdwg.mxu0
        %864 = vrot.lane.b32.xlu0 %v760, 112
        %v865 = vpop.permute.xlu0 %864
        %866 = vrot.lane.b32.xlu0 %v765, 112
        %v867 = vpop.permute.xlu0 %866
        %v869 = vsel %vm703, %v865, 0
        %v872 = vsel %vm703, %v867, 0
        %874 = vmatpush.bf16.xpose.msra.mxu0 0
        %875 = vmatpush.bf16.xpose.msra.mxu0 0
        %876 = vmatpush.bf16.xpose.msra.mxu0 0
        %877 = vmatpush.bf16.xpose.msra.mxu0 0
        %878 = vmatpush.bf16.xpose.msra.mxu0 0
        %879 = vmatpush.bf16.xpose.msra.mxu0 0
        %880 = vmatpush.bf16.xpose.msra.mxu0 0
        %881 = vmatpush.bf16.xpose.msra.mxu0 %v872
        %882 = vmatmul.bf16.gmra.mxu0 %v869
        %v883 = vpop.f32.mrf.mxu0
        %v884 = vadd.f32 0.0, %v883
        %v885 = vpop.f32.mrf.mxu0
        %886 = vdwg.mxu0
        %v887 = vmul.f32 %v884, 0.35355338
        %v888 = vsel %vm703, %v887, -inf
        %889 = vmax.xlane.f32.xlu0 %v888
        %v890 = vpop.xlane.xlu0 %889
        %v891 = vsub.f32 %v887, %v890
        %v892 = vmul.f32 %v891, 1.442695
        %v893 = vpow.pop %v892
        %v894 = vsel %vm703, %v893, 0.0
        %895 = vadd.xlane.f32.xlu0 %v894
        %v896 = vpop.xlane.xlu0 %895
        %v897 = vrcp.pop %v896
        %v898 = vmul.f32 %v893, %v897
        %v899 = vpack.c.bf16 %v898, %v898
        %900 = vrot.lane.b32.xlu0 %v802, 112
        %v901 = vpop.permute.xlu0 %900
        %v903 = vsel %vm703, %v899, 0
        %v906 = vsel %vm739, %v901, 0
        %908 = vmatpush.bf16.msra.mxu0 0
        %909 = vmatpush.bf16.msra.mxu0 0
        %910 = vmatpush.bf16.msra.mxu0 0
        %911 = vmatpush.bf16.msra.mxu0 0
        %912 = vmatpush.bf16.msra.mxu0 0
        %913 = vmatpush.bf16.msra.mxu0 0
        %914 = vmatpush.bf16.msra.mxu0 0
        %915 = vmatpush.bf16.msra.mxu0 %v906
        %916 = vmatmul.bf16.gmra.mxu0 %v903
        %v917 = vpop.f32.mrf.mxu0
        %v918 = vadd.f32 0.0, %v917
        %v919 = vpop.f32.mrf.mxu0
        %920 = vdwg.mxu0
        %v921 = vpack.c.bf16 %v918, %v918
        %v922 = vld [vmem:[#allocation5 + $0x8] sm:$0xf]
        %v924 = vsel %vm703, %v921, 0
        %v927 = vsel %vm739, %v922, 0
        %929 = vmatpush.bf16.msra.mxu0 0
        %930 = vmatpush.bf16.msra.mxu0 0
        %931 = vmatpush.bf16.msra.mxu0 0
        %932 = vmatpush.bf16.msra.mxu0 0
        %933 = vmatpush.bf16.msra.mxu0 0
        %934 = vmatpush.bf16.msra.mxu0 0
        %935 = vmatpush.bf16.msra.mxu0 0
        %936 = vmatpush.bf16.msra.mxu0 %v927
        %937 = vmatmul.bf16.gmra.mxu0 %v924
        %v938 = vpop.f32.mrf.mxu0
        %v939 = vadd.f32 0.0, %v938
        %v940 = vpop.f32.mrf.mxu0
        %941 = vdwg.mxu0
        %v942 = vadd.f32 %v861, %v939
        %943 = vrot.lane.b32.xlu0 %v760, 104
        %v944 = vpop.permute.xlu0 %943
        %945 = vrot.lane.b32.xlu0 %v765, 104
        %v946 = vpop.permute.xlu0 %945
        %v948 = vsel %vm703, %v944, 0
        %v951 = vsel %vm703, %v946, 0
        %953 = vmatpush.bf16.xpose.msra.mxu0 0
        %954 = vmatpush.bf16.xpose.msra.mxu0 0
        %955 = vmatpush.bf16.xpose.msra.mxu0 0
        %956 = vmatpush.bf16.xpose.msra.mxu0 0
        %957 = vmatpush.bf16.xpose.msra.mxu0 0
        %958 = vmatpush.bf16.xpose.msra.mxu0 0
        %959 = vmatpush.bf16.xpose.msra.mxu0 0
        %960 = vmatpush.bf16.xpose.msra.mxu0 %v951
        %961 = vmatmul.bf16.gmra.mxu0 %v948
        %v962 = vpop.f32.mrf.mxu0
        %v963 = vadd.f32 0.0, %v962
        %v964 = vpop.f32.mrf.mxu0
        %965 = vdwg.mxu0
        %v966 = vmul.f32 %v963, 0.35355338
        %v967 = vsel %vm703, %v966, -inf
        %968 = vmax.xlane.f32.xlu0 %v967
        %v969 = vpop.xlane.xlu0 %968
        %v970 = vsub.f32 %v966, %v969
        %v971 = vmul.f32 %v970, 1.442695
        %v972 = vpow.pop %v971
        %v973 = vsel %vm703, %v972, 0.0
        %974 = vadd.xlane.f32.xlu0 %v973
        %v975 = vpop.xlane.xlu0 %974
        %v976 = vrcp.pop %v975
        %v977 = vmul.f32 %v972, %v976
        %v978 = vpack.c.bf16 %v977, %v977
        %979 = vrot.lane.b32.xlu0 %v802, 104
        %v980 = vpop.permute.xlu0 %979
        %v982 = vsel %vm703, %v978, 0
        %v985 = vsel %vm739, %v980, 0
        %987 = vmatpush.bf16.msra.mxu0 0
        %988 = vmatpush.bf16.msra.mxu0 0
        %989 = vmatpush.bf16.msra.mxu0 0
        %990 = vmatpush.bf16.msra.mxu0 0
        %991 = vmatpush.bf16.msra.mxu0 0
        %992 = vmatpush.bf16.msra.mxu0 0
        %993 = vmatpush.bf16.msra.mxu0 0
        %994 = vmatpush.bf16.msra.mxu0 %v985
        %995 = vmatmul.bf16.gmra.mxu0 %v982
        %v996 = vpop.f32.mrf.mxu0
        %v997 = vadd.f32 0.0, %v996
        %v998 = vpop.f32.mrf.mxu0
        %999 = vdwg.mxu0
        %v1000 = vpack.c.bf16 %v997, %v997
        %v1001 = vld [vmem:[#allocation5 + $0xc] sm:$0xf]
        %v1003 = vsel %vm703, %v1000, 0
        %v1006 = vsel %vm739, %v1001, 0
        %1008 = vmatpush.bf16.msra.mxu0 0
        %1009 = vmatpush.bf16.msra.mxu0 0
        %1010 = vmatpush.bf16.msra.mxu0 0
        %1011 = vmatpush.bf16.msra.mxu0 0
        %1012 = vmatpush.bf16.msra.mxu0 0
        %1013 = vmatpush.bf16.msra.mxu0 0
        %1014 = vmatpush.bf16.msra.mxu0 0
        %1015 = vmatpush.bf16.msra.mxu0 %v1006
        %1016 = vmatmul.bf16.gmra.mxu0 %v1003
        %v1017 = vpop.f32.mrf.mxu0
        %v1018 = vadd.f32 0.0, %v1017
        %v1019 = vpop.f32.mrf.mxu0
        %1020 = vdwg.mxu0
        %v1021 = vadd.f32 %v942, %v1018
        %v1022 = vld [vmem:[%s8] sm:$0x1]
        %v1024 = vperm.slane %v1022, 0
        %v1026 = vadd.f32 %v1021, %v1024
        %v1027 = vadd.f32 %v595, %v1026
        %v1028 = vld [vmem:[%s9] sm:$0x1]
        %v1029 = vld [vmem:[%s10] sm:$0x1]
        %v1030 = vsel %vm617, %v1027, 0.0
        %1031 = vadd.xlane.f32.xlu0 %v1030
        %v1032 = vpop.xlane.xlu0 %1031
        %v1033 = vrcp.pop 32.0
        %v1034 = vmul.f32 32.0, %v1033
        %v1035 = vsub.f32 1.0, %v1034
        %v1036 = vmul.f32 %v1033, %v1035
        %v1037 = vadd.f32 %v1033, %v1036
        %vm1038 = vweird.f32 %v1033
        %v1039 = vsel %vm1038, %v1033, %v1037
        %v1040 = vmul.f32 %v1032, %v1039
        %v1041 = vsub.f32 %v1027, %v1040
        %v1042 = vmul.f32 %v1041, %v1041
        %v1043 = vsel %vm617, %v1042, 0.0
        %1044 = vadd.xlane.f32.xlu0 %v1043
        %v1045 = vpop.xlane.xlu0 %1044
        %v1046 = vmul.f32 %v1045, %v1039
        %v1047 = vadd.f32 %v1046, 1e-05
        %v1048 = vrsqrt.pop %v1047
        %v1049 = vmul.f32 %v1048, %v1047
        %v1050 = vmul.f32 %v1049, %v1048
        %v1051 = vmul.f32 0.5, %v1050
        %v1052 = vsub.f32 1.5, %v1051
        %v1053 = vmul.f32 %v1048, %v1052
        %vm1054 = vweird.f32 %v1047
        %vm1055 = vweird.f32 %v1048
        %vm1056 = vmor %vm1054, %vm1055
        %v1057 = vsel %vm1056, %v1048, %v1053
        %v1058 = vmul.f32 %v1041, %v1057
        %v1060 = vperm.slane %v1028, 0
        %v1062 = vmul.f32 %v1058, %v1060
        %v1064 = vperm.slane %v1029, 0
        %v1066 = vadd.f32 %v1062, %v1064
        %v1067 = vpack.c.bf16 %v1066, %v1066
        %v1068 = vld [vmem:[#allocation7] sm:$0xf]
        %v1069 = vld [vmem:[#allocation7 + $0x4] sm:$0xf]
        %v1070 = vld [vmem:[#allocation7 + $0x8] sm:$0xf]
        %v1071 = vld [vmem:[#allocation7 + $0xc] sm:$0xf]
        %v1072 = vld [vmem:[%s12] sm:$0x1]
        %v1074 = vperm.slane %v1072, 0
        %v1080 = vunpack.c.l.b16 %v1068
        %v1081 = vunpack.c.l.b16 %v1069
        %v1082 = vunpack.c.l.b16 %v1070
        %v1083 = vunpack.c.l.b16 %v1071
        %v1084 = vpack.c.b16 %v1081, %v1080
        %v1085 = vpack.c.b16 %v1083, %v1082
        %v1089 = vsel %vm617, %v1067, 0
        %1091 = vmatpush.bf16.msra.mxu0 0
        %1092 = vmatpush.bf16.msra.mxu0 0
        %1093 = vmatpush.bf16.msra.mxu0 0
        %1094 = vmatpush.bf16.msra.mxu0 0
        %1095 = vmatpush.bf16.msra.mxu0 0
        %1096 = vmatpush.bf16.msra.mxu0 0
        %1097 = vmatpush.bf16.msra.mxu0 %v1085
        %1098 = vmatpush.bf16.msra.mxu0 %v1084
        %1099 = vmatmul.bf16.gmra.mxu0 %v1089
        %v1100 = vpop.f32.mrf.mxu0
        %v1101 = vadd.f32 %v1074, %v1100
        %v1102 = vpop.f32.mrf.mxu0
        %1103 = vdwg.mxu0
        %v1104 = vmul.f32 %v1101, 0.5
        %v1105 = vmul.f32 %v1101, 0.044715
        %v1106 = vmul.f32 %v1105, %v1101
        %v1107 = vmul.f32 %v1106, %v1101
        %v1108 = vadd.f32 %v1101, %v1107
        %v1109 = vmul.f32 %v1108, 0.7978846
        %v1110 = vtanh.pop %v1109
        %v1111 = vadd.f32 %v1110, 1.0
        %v1112 = vmul.f32 %v1104, %v1111
        %v1113 = vpack.c.bf16 %v1112, %v1112
        %v1114 = vld [vmem:[%s13] sm:$0xf]
        %v1115 = vld [vmem:[%s13 + $0x4] sm:$0xf]
        %v1116 = vld [vmem:[%s13 + $0x8] sm:$0xf]
        %v1117 = vld [vmem:[%s13 + $0xc] sm:$0xf]
        %v1118 = vld [vmem:[%s13 + $0x10] sm:$0xf]
        %v1119 = vld [vmem:[%s13 + $0x14] sm:$0xf]
        %v1120 = vld [vmem:[%s13 + $0x18] sm:$0xf]
        %v1121 = vld [vmem:[%s13 + $0x1c] sm:$0xf]
        %v1122 = vld [vmem:[%s14] sm:$0x1]
        %v1124 = vperm.slane %v1122, 0
        %v1134 = vunpack.c.l.b16 %v1114
        %v1135 = vunpack.c.l.b16 %v1115
        %v1136 = vunpack.c.l.b16 %v1116
        %v1137 = vunpack.c.l.b16 %v1117
        %v1138 = vunpack.c.l.b16 %v1118
        %v1139 = vunpack.c.l.b16 %v1119
        %v1140 = vunpack.c.l.b16 %v1120
        %v1141 = vunpack.c.l.b16 %v1121
        %v1142 = vpack.c.b16 %v1135, %v1134
        %v1143 = vpack.c.b16 %v1137, %v1136
        %v1144 = vpack.c.b16 %v1139, %v1138
        %v1145 = vpack.c.b16 %v1141, %v1140
        %vm1150 = vcmask 523264
        %v1152 = vsel %vm1150, %v1113, 0
        %1154 = vmatpush.bf16.msra.mxu0 0
        %1155 = vmatpush.bf16.msra.mxu0 0
        %1156 = vmatpush.bf16.msra.mxu0 0
        %1157 = vmatpush.bf16.msra.mxu0 0
        %1158 = vmatpush.bf16.msra.mxu0 %v1145
        %1159 = vmatpush.bf16.msra.mxu0 %v1144
        %1160 = vmatpush.bf16.msra.mxu0 %v1143
        %1161 = vmatpush.bf16.msra.mxu0 %v1142
        %1162 = vmatmul.bf16.gmra.mxu0 %v1152
        %v1163 = vpop.f32.mrf.mxu0
        %v1164 = vadd.f32 %v1124, %v1163
        %v1165 = vpop.f32.mrf.mxu0
        %1166 = vdwg.mxu0
        %v1167 = vadd.f32 %v1066, %v1164
        %v1168 = vld [vmem:[%s15] sm:$0x1]
        %v1169 = vld [vmem:[%s16] sm:$0x1]
        %v1170 = vsel %vm617, %v1167, 0.0
        %1171 = vadd.xlane.f32.xlu0 %v1170
        %v1172 = vpop.xlane.xlu0 %1171
        %v1173 = vmul.f32 %v1172, %v1039
        %v1174 = vsub.f32 %v1167, %v1173
        %v1175 = vmul.f32 %v1174, %v1174
        %v1176 = vsel %vm617, %v1175, 0.0
        %1177 = vadd.xlane.f32.xlu0 %v1176
        %v1178 = vpop.xlane.xlu0 %1177
        %v1179 = vmul.f32 %v1178, %v1039
        %v1180 = vadd.f32 %v1179, 1e-05
        %v1181 = vrsqrt.pop %v1180
        %v1182 = vmul.f32 %v1181, %v1180
        %v1183 = vmul.f32 %v1182, %v1181
        %v1184 = vmul.f32 0.5, %v1183
        %v1185 = vsub.f32 1.5, %v1184
        %v1186 = vmul.f32 %v1181, %v1185
        %vm1187 = vweird.f32 %v1180
        %vm1188 = vweird.f32 %v1181
        %vm1189 = vmor %vm1187, %vm1188
        %v1190 = vsel %vm1189, %v1181, %v1186
        %v1191 = vmul.f32 %v1174, %v1190
        %v1193 = vperm.slane %v1168, 0
        %v1195 = vmul.f32 %v1191, %v1193
        %v1197 = vperm.slane %v1169, 0
        %v1199 = vadd.f32 %v1195, %v1197
        %1200 = vst.msk [vmem:[%s589] sm:$0xff] %vm617, %v1199
        %s1201 = sand.u32 %s403, 1
        %s1202 = scalar_lea.sflag [#allocation4], %s1201
        %s1203 = sand.u32 %s403, 1
        %s1204 = smul.addr %s1203, 8
        %s1205 = scalar_lea.vmem [#allocation8], %s1204
        // Predicated region
        $region101: #{tpu_custom_call.1} parent=87 // pred_check
          %p1206 = pneg %p413
        $region102: #{tpu_custom_call.1} parent=87 // pred_check_branch
          %1208 = sbr.rel (%p1206) target = $region104
        $region103: #{tpu_custom_call.1} parent=87 // pred_region
          %1210 = vsyncadd %s1202, 0
          %s1211 = smul.addr %s33, 8
          %s1212 = scalar_lea.hbm %s17, %s1211
          %s1214 = sshll.u32 %s1205, 4
          %s1215 = int_to_ptr.vmem [resolvable:$true] %s1214
          %s1216 = sshll.u32 %s1212, 4
          %s1217 = int_to_ptr.hbm [resolvable:$true] %s1216
          %1219 = dma.vmem_to_hbm [thread:$0]  %s1215, 128, %s1217, %s1202
        $region104: #{tpu_custom_call.1} parent=87 // pred_fallthru
          _
      $region88: #{tpu_custom_call.1} parent=5 // pred_fallthru
        _
      %p1220 = scmp.le.s32.totalorder 2, %s28
      // Predicated region
      $region105: #{tpu_custom_call.1} parent=5 // pred_check
        %p1221 = pneg %p1220
      $region106: #{tpu_custom_call.1} parent=5 // pred_check_branch
        %1223 = sbr.rel (%p1221) target = $region108
      $region107: #{tpu_custom_call.1} parent=5 // pred_region
        %s1224 = ssub.s32 %s28, 2
        // Predicated region
        $region109: #{tpu_custom_call.1} parent=107 // pred_check
          %p1225 = pneg %p419
        $region110: #{tpu_custom_call.1} parent=107 // pred_check_branch
          %1227 = sbr.rel (%p1225) target = $region112
        $region111: #{tpu_custom_call.1} parent=107 // pred_region
          %s1228 = sand.u32 %s404, 1
          %s1229 = scalar_lea.sflag [#allocation4], %s1228
          %s1230 = sand.u32 %s404, 1
          %s1231 = smul.addr %s1230, 8
          %s1232 = scalar_lea.vmem [#allocation8], %s1231
          %1234 = dma.done %s1229, 128
        $region112: #{tpu_custom_call.1} parent=107 // pred_fallthru
          _
      $region108: #{tpu_custom_call.1} parent=5 // pred_fallthru
        _
    $region6: #{tpu_custom_call.1} parent=1 // loop_footer
      %s32 = sadd.s32 1, %s28
    $region7: #{tpu_custom_call.1} parent=1 // loop_footer_branch
      %27 = sbr.rel target = $region3
    $region8: #{tpu_custom_call.1} parent=1 // loop_exit
      _
    %1235 = vsyncpa [#allocation3], 1
    %s1236 = scalar_lea.sflag [#allocation3], 1
    %1237 = vsyncpa %s1236, 1
    %1238 = vsyncpa [#allocation6], 1
    %1239 = vsyncpa [#allocation4], 1
    %s1240 = scalar_lea.sflag [#allocation4], 1
    %1241 = vsyncpa %s1240, 1

</llo_original>
